<compile_context>
chip_gen: v5e
topology: v5e:2x2
jax: 0.10.0
libtpu: 0.0.40
codegen_flags: <defaults>
</compile_context>

<pallas_src>
import jax
import jax.numpy as jnp
from jax.experimental import pallas as pl
from jax.experimental.pallas import tpu as pltpu

GROUP_CHANNELS = 16   # standard involution: group_channels = 16
REDUCTION = 4         # standard involution reduction ratio


def _gelu_tanh(x):
    # tanh-approximation GELU: the transcendental lowers to the EUP slot
    # (nearly free vs. VPU); max deviation from exact erf-GELU is ~1e-3.
    c = 0.7978845608028654  # sqrt(2/pi)
    return 0.5 * x * (1.0 + jnp.tanh(c * (x + 0.044715 * x * x * x)))


def _make_block_kernel(H, W, C, K, pad):
    KK = K * K
    HW = H * W

    def kernel(xpad_ref,
               wred_ref, bnsc_ref, bnsh_ref, wspan_ref, bspan_ref,
               lng_ref, lnb_ref, w1_ref, b1_ref, w2_ref, b2_ref,
               out_ref):
        # Center of the padded tile == the original image tile (no second DMA).
        xc = xpad_ref[0, pad:pad + H, pad:pad + W, :]              # (H, W, C) f32
        xcf = xc.reshape(HW, C)

        # ---- involution kernel-generation branch ----------------------------
        # 1x1 conv -> BN (folded, inference) -> ReLU -> 1x1 conv.
        # MXU matmuls in bf16, f32 accumulation.
        r = jnp.dot(xcf.astype(jnp.bfloat16), wred_ref[...],
                    preferred_element_type=jnp.float32)
        r = jnp.maximum(r * bnsc_ref[...] + bnsh_ref[...], 0.0)   # (HW, Cr) f32
        # w_span was expanded host-side to (Cr, KK*C) (group repeat folded in),
        # so each tap yields a full C-wide per-pixel weight slab -> no masked
        # 16-lane slices/stores in the accumulation loop.
        wk = jnp.dot(r.astype(jnp.bfloat16), wspan_ref[...],
                     preferred_element_type=jnp.float32) + bspan_ref[...]
        wk = wk.reshape(H, W, KK * C)

        # ---- unfold + per-pixel weighted sum: one full-width FMA per tap ----
        acc = jnp.zeros((H, W, C), jnp.float32)
        for kk in range(KK):                                       # static unroll
            dy, dx = kk // K, kk % K
            xs = xpad_ref[0, dy:dy + H, dx:dx + W, :]              # (H, W, C)
            acc = acc + xs * wk[:, :, kk * C:(kk + 1) * C]
        inv_out = acc.reshape(HW, C)

        # ---- LayerNorm over channels (eps = 1e-6), single-pass stats --------
        s1 = jnp.sum(inv_out, axis=-1, keepdims=True)
        s2 = jnp.sum(inv_out * inv_out, axis=-1, keepdims=True)
        mu = s1 * (1.0 / C)
        var = s2 * (1.0 / C) - mu * mu
        nf = (inv_out - mu) * jax.lax.rsqrt(var + 1e-6)
        nf = nf * lng_ref[...] + lnb_ref[...]

        # ---- MLP: pwconv1 -> GELU -> (Dropout = identity) -> pwconv2 --------
        h = jnp.dot(nf.astype(jnp.bfloat16), w1_ref[...],
                    preferred_element_type=jnp.float32) + b1_ref[...]
        h = _gelu_tanh(h)
        # TODO(synk): nn.Dropout is identity in eval/inference mode; training
        # mode stochastic dropout is not implemented here.
        y = jnp.dot(h.astype(jnp.bfloat16), w2_ref[...],
                    preferred_element_type=jnp.float32) + b2_ref[...]

        # ---- residual --------------------------------------------------------
        out_ref[0] = (xcf + y).reshape(H, W, C)

    return kernel


def block_forward(x_nchw, params, kernel_size):
    """InvNeXt Block forward.  x_nchw: (B, C, H, W) float32."""
    B, C, H, W = x_nchw.shape
    K = kernel_size
    KK = K * K
    GC = min(GROUP_CHANNELS, C)
    G = C // GC
    Cr = C // REDUCTION
    pad = (K - 1) // 2
    HW = H * W

    x = jnp.transpose(x_nchw, (0, 2, 3, 1)).astype(jnp.float32)        # NHWC
    xpad = jnp.pad(x, ((0, 0), (pad, pad), (pad, pad), (0, 0)))        # unfold halo

    # -- param prep: fold the group->channel repeat into w_span / b_span
    #    (packing (kk, c), channel minor) and cast MXU weights to bf16.
    w_span = params["w_span"].reshape(Cr, G, KK)
    w_span_exp = jnp.transpose(jnp.repeat(w_span, GC, axis=1), (0, 2, 1))
    w_span_exp = w_span_exp.reshape(Cr, KK * C)
    b_span = params["b_span"].reshape(1, G, KK)
    b_span_exp = jnp.transpose(jnp.repeat(b_span, GC, axis=1), (0, 2, 1))
    b_span_exp = b_span_exp.reshape(1, KK * C)

    p_args = [
        params["w_red"].astype(jnp.bfloat16),
        params["bn_scale"], params["bn_shift"],
        w_span_exp.astype(jnp.bfloat16), b_span_exp,
        params["ln_g"], params["ln_b"],
        params["w1"].astype(jnp.bfloat16), params["b1"],
        params["w2"].astype(jnp.bfloat16), params["b2"],
    ]

    pad_spec = pl.BlockSpec((1, H + 2 * pad, W + 2 * pad, C),
                            lambda b: (b, 0, 0, 0))
    out_spec = pl.BlockSpec((1, H, W, C), lambda b: (b, 0, 0, 0))

    def pspec(a):
        # Constant index_map -> parameter blocks are DMA'd once and reused
        # across the whole grid (only the double-buffer VMEM cost remains).
        return pl.BlockSpec(a.shape, lambda b: (0, 0))

    # Rough VMEM budget: double-buffered image blocks + params + the live
    # intermediates (per-pixel kernels wk and the 4C-wide MLP hidden).
    def nbytes(a):
        return int(a.size) * a.dtype.itemsize
    est = (2 * (H + 2 * pad) * (W + 2 * pad) * C * 4
           + 2 * H * W * C * 4
           + 2 * sum(nbytes(a) for a in p_args)
           + HW * KK * C * 4 + HW * 4 * C * 4 + 4 * HW * C * 4)
    vmem_limit = int(min(max(2 * est, 16 * 2 ** 20), 32 * 2 ** 20))

    kernel = _make_block_kernel(H, W, C, K, pad)
    out_nhwc = pl.pallas_call(
        kernel,
        out_shape=jax.ShapeDtypeStruct((B, H, W, C), jnp.float32),
        grid_spec=pltpu.PrefetchScalarGridSpec(
            num_scalar_prefetch=0,
            grid=(B,),
            in_specs=[pad_spec] + [pspec(a) for a in p_args],
            out_specs=out_spec,
        ),
        compiler_params=pltpu.CompilerParams(
            dimension_semantics=("parallel",),
            vmem_limit_bytes=vmem_limit),
    )(xpad, *p_args)
    return jnp.transpose(out_nhwc, (0, 3, 1, 2))                       # back to NCHW


def init_params(key, dim, kernel_size):
    """Deterministic synthetic parameters matching the module's shapes."""
    K = kernel_size
    KK = K * K
    GC = min(GROUP_CHANNELS, dim)
    G = dim // GC
    Cr = dim // REDUCTION
    ks = jax.random.split(key, 13)

    def nrm(k, shape, scale):
        return scale * jax.random.normal(k, shape, jnp.float32)

    # involution.conv1: 1x1 conv (no bias; BN follows) + BN (folded) + ReLU
    w_red = nrm(ks[0], (dim, Cr), 0.2)
    bn_gamma = 1.0 + nrm(ks[1], (1, Cr), 0.1)
    bn_beta = nrm(ks[2], (1, Cr), 0.1)
    bn_mean = nrm(ks[3], (1, Cr), 0.1)
    bn_var = jnp.abs(nrm(ks[4], (1, Cr), 1.0)) + 0.5
    bn_scale = bn_gamma / jnp.sqrt(bn_var + 1e-5)
    bn_shift = bn_beta - bn_mean * bn_scale
    # involution.conv2: 1x1 conv -> K*K*groups per-pixel kernel weights,
    # columns packed as (g, kk).
    w_span = nrm(ks[5], (Cr, G * KK), 0.2)
    b_span = nrm(ks[6], (1, G * KK), 0.1)
    # LayerNorm(dim, eps=1e-6)
    ln_g = 1.0 + nrm(ks[7], (1, dim), 0.1)
    ln_b = nrm(ks[8], (1, dim), 0.1)
    # pwconv1 (dim -> 4*dim), pwconv2 (4*dim -> dim)
    w1 = nrm(ks[9], (dim, 4 * dim), 0.2)
    b1 = nrm(ks[10], (1, 4 * dim), 0.1)
    w2 = nrm(ks[11], (4 * dim, dim), 0.2)
    b2 = nrm(ks[12], (1, dim), 0.1)
    return dict(w_red=w_red, bn_scale=bn_scale, bn_shift=bn_shift,
                w_span=w_span, b_span=b_span, ln_g=ln_g, ln_b=ln_b,
                w1=w1, b1=b1, w2=w2, b2=b2)


def reference(x_nchw, P, kernel_size):
    """Pure-JAX reference mirroring the kernel's mixed bf16/f32 precision and
    tanh-GELU, so the self-test tightly validates the Pallas implementation
    (tiling, unfold indexing, weight expansion, LayerNorm, residual)."""
    K = kernel_size
    KK = K * K
    bf = jnp.bfloat16
    x = jnp.transpose(x_nchw, (0, 2, 3, 1)).astype(jnp.float32)
    B, H, W, C = x.shape
    GC = min(GROUP_CHANNELS, C)
    pad = (K - 1) // 2
    xpad = jnp.pad(x, ((0, 0), (pad, pad), (pad, pad), (0, 0)))
    xf = x.reshape(B, H * W, C)
    r = jnp.maximum(
        jnp.dot(xf.astype(bf), P["w_red"].astype(bf),
                preferred_element_type=jnp.float32)
        * P["bn_scale"] + P["bn_shift"], 0.0)
    G = C // GC
    wk = (jnp.dot(r.astype(bf), P["w_span"].astype(bf),
                  preferred_element_type=jnp.float32)
          + P["b_span"]).reshape(B, H, W, G, KK)
    acc = jnp.zeros((B, H, W, C), jnp.float32)
    for kk in range(KK):
        dy, dx = kk // K, kk % K
        xs = xpad[:, dy:dy + H, dx:dx + W, :]
        acc = acc + xs * jnp.repeat(wk[..., kk], GC, axis=-1)
    mu = acc.mean(-1, keepdims=True)
    var = ((acc - mu) ** 2).mean(-1, keepdims=True)
    n = (acc - mu) * jax.lax.rsqrt(var + 1e-6)
    n = n * P["ln_g"].reshape(1, 1, 1, C) + P["ln_b"].reshape(1, 1, 1, C)
    nf = n.reshape(B, H * W, C)
    h = _gelu_tanh(jnp.dot(nf.astype(bf), P["w1"].astype(bf),
                           preferred_element_type=jnp.float32) + P["b1"])
    y = jnp.dot(h.astype(bf), P["w2"].astype(bf),
                preferred_element_type=jnp.float32) + P["b2"]
    out = x + y.reshape(B, H, W, C)
    return jnp.transpose(out, (0, 3, 1, 2))


if __name__ == "__main__":
    B, dim, H, W = 2, 16, 8, 8
    kernel_size = 3  # stride must be 1 (residual add); dropout = identity (eval)

    key = jax.random.PRNGKey(0)
    kx, kp = jax.random.split(key)
    x = jax.random.normal(kx, (B, dim, H, W), jnp.float32)
    params = init_params(kp, dim, kernel_size)

    out = jax.block_until_ready(block_forward(x, params, kernel_size))
    ref = reference(x, params, kernel_size)
    assert out.shape == (B, dim, H, W)
    err = float(jnp.max(jnp.abs(out - ref)))
    assert err < 2e-2, f"max abs err {err}"
    print("KERNEL_OK")
</pallas_src>

<mosaic_0001>
module attributes {stable_mosaic.version = 11 : i64} {
  func.func @kernel(%arg0: i32, %arg1: memref<1x10x10x16xf32, #tpu.memory_space<vmem>>, %arg2: memref<16x4xbf16, #tpu.memory_space<vmem>>, %arg3: memref<1x4xf32, #tpu.memory_space<vmem>>, %arg4: memref<1x4xf32, #tpu.memory_space<vmem>>, %arg5: memref<4x144xbf16, #tpu.memory_space<vmem>>, %arg6: memref<1x144xf32, #tpu.memory_space<vmem>>, %arg7: memref<1x16xf32, #tpu.memory_space<vmem>>, %arg8: memref<1x16xf32, #tpu.memory_space<vmem>>, %arg9: memref<16x64xbf16, #tpu.memory_space<vmem>>, %arg10: memref<1x64xf32, #tpu.memory_space<vmem>>, %arg11: memref<64x16xbf16, #tpu.memory_space<vmem>>, %arg12: memref<1x16xf32, #tpu.memory_space<vmem>>, %arg13: memref<1x8x8x16xf32, #tpu.memory_space<vmem>>) attributes {dimension_semantics = [#tpu.dimension_semantics<parallel>], iteration_bounds = array<i64: 2>, scalar_prefetch = 0 : i64, scratch_operands = 0 : i64, tpu.core_type = #tpu.core_type<tc>, window_params = [{transform_indices = @transform_0, window_bounds = array<i64: 1, 10, 10, 16>}, {pipeline_mode = #tpu.pipeline_mode<synchronous>, transform_indices = @transform_1, window_bounds = array<i64: 16, 4>}, {pipeline_mode = #tpu.pipeline_mode<synchronous>, transform_indices = @transform_2, window_bounds = array<i64: 1, 4>}, {pipeline_mode = #tpu.pipeline_mode<synchronous>, transform_indices = @transform_3, window_bounds = array<i64: 1, 4>}, {pipeline_mode = #tpu.pipeline_mode<synchronous>, transform_indices = @transform_4, window_bounds = array<i64: 4, 144>}, {pipeline_mode = #tpu.pipeline_mode<synchronous>, transform_indices = @transform_5, window_bounds = array<i64: 1, 144>}, {pipeline_mode = #tpu.pipeline_mode<synchronous>, transform_indices = @transform_6, window_bounds = array<i64: 1, 16>}, {pipeline_mode = #tpu.pipeline_mode<synchronous>, transform_indices = @transform_7, window_bounds = array<i64: 1, 16>}, {pipeline_mode = #tpu.pipeline_mode<synchronous>, transform_indices = @transform_8, window_bounds = array<i64: 16, 64>}, {pipeline_mode = #tpu.pipeline_mode<synchronous>, transform_indices = @transform_9, window_bounds = array<i64: 1, 64>}, {pipeline_mode = #tpu.pipeline_mode<synchronous>, transform_indices = @transform_10, window_bounds = array<i64: 64, 16>}, {pipeline_mode = #tpu.pipeline_mode<synchronous>, transform_indices = @transform_11, window_bounds = array<i64: 1, 16>}, {transform_indices = @transform_12, window_bounds = array<i64: 1, 8, 8, 16>}]} {
    %c0 = arith.constant 0 : index
    %c1 = arith.constant 1 : index
    %c1_0 = arith.constant 1 : index
    %c0_1 = arith.constant 0 : index
    %0 = vector.load %arg1[%c0, %c1, %c1_0, %c0_1] : memref<1x10x10x16xf32, #tpu.memory_space<vmem>>, vector<1x8x8x16xf32>
    %1 = vector.shape_cast %0 : vector<1x8x8x16xf32> to vector<8x8x16xf32>
    %2 = vector.shape_cast %1 : vector<8x8x16xf32> to vector<64x16xf32>
    %3 = arith.truncf %2 : vector<64x16xf32> to vector<64x16xbf16>
    %c0_2 = arith.constant 0 : index
    %c0_3 = arith.constant 0 : index
    %4 = vector.load %arg2[%c0_2, %c0_3] : memref<16x4xbf16, #tpu.memory_space<vmem>>, vector<16x4xbf16>
    %cst = arith.constant dense<0.000000e+00> : vector<64x4xf32>
    %5 = tpu.matmul %3, %4, %cst {dimension_numbers = #tpu.dot_dimension_numbers<[1], [0], [0], [1], [0, 0, 1, 1], [], []>} : vector<64x16xbf16>, vector<16x4xbf16>, vector<64x4xf32> -> vector<64x4xf32>
    %c0_4 = arith.constant 0 : index
    %c0_5 = arith.constant 0 : index
    %6 = vector.load %arg3[%c0_4, %c0_5] : memref<1x4xf32, #tpu.memory_space<vmem>>, vector<1x4xf32>
    %7 = vector.broadcast %6 : vector<1x4xf32> to vector<64x4xf32>
    %8 = arith.mulf %5, %7 : vector<64x4xf32>
    %c0_6 = arith.constant 0 : index
    %c0_7 = arith.constant 0 : index
    %9 = vector.load %arg4[%c0_6, %c0_7] : memref<1x4xf32, #tpu.memory_space<vmem>>, vector<1x4xf32>
    %10 = vector.broadcast %9 : vector<1x4xf32> to vector<64x4xf32>
    %11 = arith.addf %8, %10 : vector<64x4xf32>
    %cst_8 = arith.constant 0.000000e+00 : f32
    %12 = vector.broadcast %cst_8 : f32 to vector<64x4xf32>
    %13 = arith.maximumf %11, %12 : vector<64x4xf32>
    %14 = arith.truncf %13 : vector<64x4xf32> to vector<64x4xbf16>
    %c0_9 = arith.constant 0 : index
    %c0_10 = arith.constant 0 : index
    %15 = vector.load %arg5[%c0_9, %c0_10] : memref<4x144xbf16, #tpu.memory_space<vmem>>, vector<4x144xbf16>
    %cst_11 = arith.constant dense<0.000000e+00> : vector<64x144xf32>
    %16 = tpu.matmul %14, %15, %cst_11 {dimension_numbers = #tpu.dot_dimension_numbers<[1], [0], [0], [1], [0, 0, 1, 1], [], []>} : vector<64x4xbf16>, vector<4x144xbf16>, vector<64x144xf32> -> vector<64x144xf32>
    %c0_12 = arith.constant 0 : index
    %c0_13 = arith.constant 0 : index
    %17 = vector.load %arg6[%c0_12, %c0_13] : memref<1x144xf32, #tpu.memory_space<vmem>>, vector<1x144xf32>
    %18 = vector.broadcast %17 : vector<1x144xf32> to vector<64x144xf32>
    %19 = arith.addf %16, %18 : vector<64x144xf32>
    %20 = vector.shape_cast %19 : vector<64x144xf32> to vector<8x8x144xf32>
    %cst_14 = arith.constant 0.000000e+00 : f32
    %21 = vector.broadcast %cst_14 : f32 to vector<8x8x16xf32>
    %c0_15 = arith.constant 0 : index
    %c0_16 = arith.constant 0 : index
    %c0_17 = arith.constant 0 : index
    %c0_18 = arith.constant 0 : index
    %22 = vector.load %arg1[%c0_15, %c0_16, %c0_17, %c0_18] : memref<1x10x10x16xf32, #tpu.memory_space<vmem>>, vector<1x8x8x16xf32>
    %23 = vector.shape_cast %22 : vector<1x8x8x16xf32> to vector<8x8x16xf32>
    %24 = vector.extract_strided_slice %20 {offsets = [0, 0, 0], sizes = [8, 8, 16], strides = [1, 1, 1]} : vector<8x8x144xf32> to vector<8x8x16xf32>
    %25 = arith.mulf %23, %24 : vector<8x8x16xf32>
    %26 = arith.addf %21, %25 : vector<8x8x16xf32>
    %c0_19 = arith.constant 0 : index
    %c0_20 = arith.constant 0 : index
    %c1_21 = arith.constant 1 : index
    %c0_22 = arith.constant 0 : index
    %27 = vector.load %arg1[%c0_19, %c0_20, %c1_21, %c0_22] : memref<1x10x10x16xf32, #tpu.memory_space<vmem>>, vector<1x8x8x16xf32>
    %28 = vector.shape_cast %27 : vector<1x8x8x16xf32> to vector<8x8x16xf32>
    %29 = vector.extract_strided_slice %20 {offsets = [0, 0, 16], sizes = [8, 8, 16], strides = [1, 1, 1]} : vector<8x8x144xf32> to vector<8x8x16xf32>
    %30 = arith.mulf %28, %29 : vector<8x8x16xf32>
    %31 = arith.addf %26, %30 : vector<8x8x16xf32>
    %c0_23 = arith.constant 0 : index
    %c0_24 = arith.constant 0 : index
    %c2 = arith.constant 2 : index
    %c0_25 = arith.constant 0 : index
    %32 = vector.load %arg1[%c0_23, %c0_24, %c2, %c0_25] : memref<1x10x10x16xf32, #tpu.memory_space<vmem>>, vector<1x8x8x16xf32>
    %33 = vector.shape_cast %32 : vector<1x8x8x16xf32> to vector<8x8x16xf32>
    %34 = vector.extract_strided_slice %20 {offsets = [0, 0, 32], sizes = [8, 8, 16], strides = [1, 1, 1]} : vector<8x8x144xf32> to vector<8x8x16xf32>
    %35 = arith.mulf %33, %34 : vector<8x8x16xf32>
    %36 = arith.addf %31, %35 : vector<8x8x16xf32>
    %c0_26 = arith.constant 0 : index
    %c1_27 = arith.constant 1 : index
    %c0_28 = arith.constant 0 : index
    %c0_29 = arith.constant 0 : index
    %37 = vector.load %arg1[%c0_26, %c1_27, %c0_28, %c0_29] : memref<1x10x10x16xf32, #tpu.memory_space<vmem>>, vector<1x8x8x16xf32>
    %38 = vector.shape_cast %37 : vector<1x8x8x16xf32> to vector<8x8x16xf32>
    %39 = vector.extract_strided_slice %20 {offsets = [0, 0, 48], sizes = [8, 8, 16], strides = [1, 1, 1]} : vector<8x8x144xf32> to vector<8x8x16xf32>
    %40 = arith.mulf %38, %39 : vector<8x8x16xf32>
    %41 = arith.addf %36, %40 : vector<8x8x16xf32>
    %c0_30 = arith.constant 0 : index
    %c1_31 = arith.constant 1 : index
    %c1_32 = arith.constant 1 : index
    %c0_33 = arith.constant 0 : index
    %42 = vector.load %arg1[%c0_30, %c1_31, %c1_32, %c0_33] : memref<1x10x10x16xf32, #tpu.memory_space<vmem>>, vector<1x8x8x16xf32>
    %43 = vector.shape_cast %42 : vector<1x8x8x16xf32> to vector<8x8x16xf32>
    %44 = vector.extract_strided_slice %20 {offsets = [0, 0, 64], sizes = [8, 8, 16], strides = [1, 1, 1]} : vector<8x8x144xf32> to vector<8x8x16xf32>
    %45 = arith.mulf %43, %44 : vector<8x8x16xf32>
    %46 = arith.addf %41, %45 : vector<8x8x16xf32>
    %c0_34 = arith.constant 0 : index
    %c1_35 = arith.constant 1 : index
    %c2_36 = arith.constant 2 : index
    %c0_37 = arith.constant 0 : index
    %47 = vector.load %arg1[%c0_34, %c1_35, %c2_36, %c0_37] : memref<1x10x10x16xf32, #tpu.memory_space<vmem>>, vector<1x8x8x16xf32>
    %48 = vector.shape_cast %47 : vector<1x8x8x16xf32> to vector<8x8x16xf32>
    %49 = vector.extract_strided_slice %20 {offsets = [0, 0, 80], sizes = [8, 8, 16], strides = [1, 1, 1]} : vector<8x8x144xf32> to vector<8x8x16xf32>
    %50 = arith.mulf %48, %49 : vector<8x8x16xf32>
    %51 = arith.addf %46, %50 : vector<8x8x16xf32>
    %c0_38 = arith.constant 0 : index
    %c2_39 = arith.constant 2 : index
    %c0_40 = arith.constant 0 : index
    %c0_41 = arith.constant 0 : index
    %52 = vector.load %arg1[%c0_38, %c2_39, %c0_40, %c0_41] : memref<1x10x10x16xf32, #tpu.memory_space<vmem>>, vector<1x8x8x16xf32>
    %53 = vector.shape_cast %52 : vector<1x8x8x16xf32> to vector<8x8x16xf32>
    %54 = vector.extract_strided_slice %20 {offsets = [0, 0, 96], sizes = [8, 8, 16], strides = [1, 1, 1]} : vector<8x8x144xf32> to vector<8x8x16xf32>
    %55 = arith.mulf %53, %54 : vector<8x8x16xf32>
    %56 = arith.addf %51, %55 : vector<8x8x16xf32>
    %c0_42 = arith.constant 0 : index
    %c2_43 = arith.constant 2 : index
    %c1_44 = arith.constant 1 : index
    %c0_45 = arith.constant 0 : index
    %57 = vector.load %arg1[%c0_42, %c2_43, %c1_44, %c0_45] : memref<1x10x10x16xf32, #tpu.memory_space<vmem>>, vector<1x8x8x16xf32>
    %58 = vector.shape_cast %57 : vector<1x8x8x16xf32> to vector<8x8x16xf32>
    %59 = vector.extract_strided_slice %20 {offsets = [0, 0, 112], sizes = [8, 8, 16], strides = [1, 1, 1]} : vector<8x8x144xf32> to vector<8x8x16xf32>
    %60 = arith.mulf %58, %59 : vector<8x8x16xf32>
    %61 = arith.addf %56, %60 : vector<8x8x16xf32>
    %c0_46 = arith.constant 0 : index
    %c2_47 = arith.constant 2 : index
    %c2_48 = arith.constant 2 : index
    %c0_49 = arith.constant 0 : index
    %62 = vector.load %arg1[%c0_46, %c2_47, %c2_48, %c0_49] : memref<1x10x10x16xf32, #tpu.memory_space<vmem>>, vector<1x8x8x16xf32>
    %63 = vector.shape_cast %62 : vector<1x8x8x16xf32> to vector<8x8x16xf32>
    %64 = vector.extract_strided_slice %20 {offsets = [0, 0, 128], sizes = [8, 8, 16], strides = [1, 1, 1]} : vector<8x8x144xf32> to vector<8x8x16xf32>
    %65 = arith.mulf %63, %64 : vector<8x8x16xf32>
    %66 = arith.addf %61, %65 : vector<8x8x16xf32>
    %67 = vector.shape_cast %66 : vector<8x8x16xf32> to vector<64x16xf32>
    %cst_50 = arith.constant dense<0.000000e+00> : vector<64xf32>
    %68 = vector.multi_reduction <add>, %67, %cst_50 [1] : vector<64x16xf32> to vector<64xf32>
    %69 = vector.shape_cast %68 : vector<64xf32> to vector<64x1xf32>
    %70 = arith.mulf %67, %67 : vector<64x16xf32>
    %cst_51 = arith.constant dense<0.000000e+00> : vector<64xf32>
    %71 = vector.multi_reduction <add>, %70, %cst_51 [1] : vector<64x16xf32> to vector<64xf32>
    %72 = vector.shape_cast %71 : vector<64xf32> to vector<64x1xf32>
    %cst_52 = arith.constant 6.250000e-02 : f32
    %73 = vector.broadcast %cst_52 : f32 to vector<64x1xf32>
    %74 = arith.mulf %69, %73 : vector<64x1xf32>
    %cst_53 = arith.constant 6.250000e-02 : f32
    %75 = vector.broadcast %cst_53 : f32 to vector<64x1xf32>
    %76 = arith.mulf %72, %75 : vector<64x1xf32>
    %77 = arith.mulf %74, %74 : vector<64x1xf32>
    %78 = arith.subf %76, %77 : vector<64x1xf32>
    %79 = vector.broadcast %74 : vector<64x1xf32> to vector<64x16xf32>
    %80 = arith.subf %67, %79 : vector<64x16xf32>
    %cst_54 = arith.constant 9.99999997E-7 : f32
    %81 = vector.broadcast %cst_54 : f32 to vector<64x1xf32>
    %82 = arith.addf %78, %81 : vector<64x1xf32>
    %83 = math.rsqrt %82 : vector<64x1xf32>
    %84 = vector.broadcast %83 : vector<64x1xf32> to vector<64x16xf32>
    %85 = arith.mulf %80, %84 : vector<64x16xf32>
    %c0_55 = arith.constant 0 : index
    %c0_56 = arith.constant 0 : index
    %86 = vector.load %arg7[%c0_55, %c0_56] : memref<1x16xf32, #tpu.memory_space<vmem>>, vector<1x16xf32>
    %87 = vector.broadcast %86 : vector<1x16xf32> to vector<64x16xf32>
    %88 = arith.mulf %85, %87 : vector<64x16xf32>
    %c0_57 = arith.constant 0 : index
    %c0_58 = arith.constant 0 : index
    %89 = vector.load %arg8[%c0_57, %c0_58] : memref<1x16xf32, #tpu.memory_space<vmem>>, vector<1x16xf32>
    %90 = vector.broadcast %89 : vector<1x16xf32> to vector<64x16xf32>
    %91 = arith.addf %88, %90 : vector<64x16xf32>
    %92 = arith.truncf %91 : vector<64x16xf32> to vector<64x16xbf16>
    %c0_59 = arith.constant 0 : index
    %c0_60 = arith.constant 0 : index
    %93 = vector.load %arg9[%c0_59, %c0_60] : memref<16x64xbf16, #tpu.memory_space<vmem>>, vector<16x64xbf16>
    %cst_61 = arith.constant dense<0.000000e+00> : vector<64x64xf32>
    %94 = tpu.matmul %92, %93, %cst_61 {dimension_numbers = #tpu.dot_dimension_numbers<[1], [0], [0], [1], [0, 0, 1, 1], [], []>} : vector<64x16xbf16>, vector<16x64xbf16>, vector<64x64xf32> -> vector<64x64xf32>
    %c0_62 = arith.constant 0 : index
    %c0_63 = arith.constant 0 : index
    %95 = vector.load %arg10[%c0_62, %c0_63] : memref<1x64xf32, #tpu.memory_space<vmem>>, vector<1x64xf32>
    %96 = vector.broadcast %95 : vector<1x64xf32> to vector<64x64xf32>
    %97 = arith.addf %94, %96 : vector<64x64xf32>
    %cst_64 = arith.constant 5.000000e-01 : f32
    %98 = vector.broadcast %cst_64 : f32 to vector<64x64xf32>
    %99 = arith.mulf %98, %97 : vector<64x64xf32>
    %cst_65 = arith.constant 4.471500e-02 : f32
    %100 = vector.broadcast %cst_65 : f32 to vector<64x64xf32>
    %101 = arith.mulf %100, %97 : vector<64x64xf32>
    %102 = arith.mulf %101, %97 : vector<64x64xf32>
    %103 = arith.mulf %102, %97 : vector<64x64xf32>
    %104 = arith.addf %97, %103 : vector<64x64xf32>
    %cst_66 = arith.constant 0.797884583 : f32
    %105 = vector.broadcast %cst_66 : f32 to vector<64x64xf32>
    %106 = arith.mulf %105, %104 : vector<64x64xf32>
    %107 = math.tanh %106 : vector<64x64xf32>
    %cst_67 = arith.constant 1.000000e+00 : f32
    %108 = vector.broadcast %cst_67 : f32 to vector<64x64xf32>
    %109 = arith.addf %108, %107 : vector<64x64xf32>
    %110 = arith.mulf %99, %109 : vector<64x64xf32>
    %111 = arith.truncf %110 : vector<64x64xf32> to vector<64x64xbf16>
    %c0_68 = arith.constant 0 : index
    %c0_69 = arith.constant 0 : index
    %112 = vector.load %arg11[%c0_68, %c0_69] : memref<64x16xbf16, #tpu.memory_space<vmem>>, vector<64x16xbf16>
    %cst_70 = arith.constant dense<0.000000e+00> : vector<64x16xf32>
    %113 = tpu.matmul %111, %112, %cst_70 {dimension_numbers = #tpu.dot_dimension_numbers<[1], [0], [0], [1], [0, 0, 1, 1], [], []>} : vector<64x64xbf16>, vector<64x16xbf16>, vector<64x16xf32> -> vector<64x16xf32>
    %c0_71 = arith.constant 0 : index
    %c0_72 = arith.constant 0 : index
    %114 = vector.load %arg12[%c0_71, %c0_72] : memref<1x16xf32, #tpu.memory_space<vmem>>, vector<1x16xf32>
    %115 = vector.broadcast %114 : vector<1x16xf32> to vector<64x16xf32>
    %116 = arith.addf %113, %115 : vector<64x16xf32>
    %117 = arith.addf %2, %116 : vector<64x16xf32>
    %118 = vector.shape_cast %117 : vector<64x16xf32> to vector<8x8x16xf32>
    %c0_73 = arith.constant 0 : index
    %c0_74 = arith.constant 0 : index
    %c0_75 = arith.constant 0 : index
    %c0_76 = arith.constant 0 : index
    %119 = vector.load %arg13[%c0_73, %c0_74, %c0_75, %c0_76] : memref<1x8x8x16xf32, #tpu.memory_space<vmem>>, vector<1x8x8x16xf32>
    %120 = vector.shape_cast %119 : vector<1x8x8x16xf32> to vector<8x8x16xf32>
    %121 = vector.shape_cast %118 : vector<8x8x16xf32> to vector<1x8x8x16xf32>
    tpu.vector_store %arg13[%c0_73, %c0_74, %c0_75, %c0_76], %121 {strides = array<i32>} : memref<1x8x8x16xf32, #tpu.memory_space<vmem>>, vector<1x8x8x16xf32>,
    return
  }
  func.func @transform_0(%arg0: i32) -> (i32, i32, i32, i32) {
    %c0_i32 = arith.constant 0 : i32
    %c0_i32_0 = arith.constant 0 : i32
    %c0_i32_1 = arith.constant 0 : i32
    %c0_i32_2 = arith.constant 0 : i32
    return %arg0, %c0_i32, %c0_i32_0, %c0_i32_1 : i32, i32, i32, i32
  }
  func.func @transform_1(%arg0: i32) -> (i32, i32) {
    %c0_i32 = arith.constant 0 : i32
    %c0_i32_0 = arith.constant 0 : i32
    %c0_i32_1 = arith.constant 0 : i32
    return %c0_i32, %c0_i32_0 : i32, i32
  }
  func.func @transform_2(%arg0: i32) -> (i32, i32) {
    %c0_i32 = arith.constant 0 : i32
    %c0_i32_0 = arith.constant 0 : i32
    %c0_i32_1 = arith.constant 0 : i32
    return %c0_i32, %c0_i32_0 : i32, i32
  }
  func.func @transform_3(%arg0: i32) -> (i32, i32) {
    %c0_i32 = arith.constant 0 : i32
    %c0_i32_0 = arith.constant 0 : i32
    %c0_i32_1 = arith.constant 0 : i32
    return %c0_i32, %c0_i32_0 : i32, i32
  }
  func.func @transform_4(%arg0: i32) -> (i32, i32) {
    %c0_i32 = arith.constant 0 : i32
    %c0_i32_0 = arith.constant 0 : i32
    %c0_i32_1 = arith.constant 0 : i32
    return %c0_i32, %c0_i32_0 : i32, i32
  }
  func.func @transform_5(%arg0: i32) -> (i32, i32) {
    %c0_i32 = arith.constant 0 : i32
    %c0_i32_0 = arith.constant 0 : i32
    %c0_i32_1 = arith.constant 0 : i32
    return %c0_i32, %c0_i32_0 : i32, i32
  }
  func.func @transform_6(%arg0: i32) -> (i32, i32) {
    %c0_i32 = arith.constant 0 : i32
    %c0_i32_0 = arith.constant 0 : i32
    %c0_i32_1 = arith.constant 0 : i32
    return %c0_i32, %c0_i32_0 : i32, i32
  }
  func.func @transform_7(%arg0: i32) -> (i32, i32) {
    %c0_i32 = arith.constant 0 : i32
    %c0_i32_0 = arith.constant 0 : i32
    %c0_i32_1 = arith.constant 0 : i32
    return %c0_i32, %c0_i32_0 : i32, i32
  }
  func.func @transform_8(%arg0: i32) -> (i32, i32) {
    %c0_i32 = arith.constant 0 : i32
    %c0_i32_0 = arith.constant 0 : i32
    %c0_i32_1 = arith.constant 0 : i32
    return %c0_i32, %c0_i32_0 : i32, i32
  }
  func.func @transform_9(%arg0: i32) -> (i32, i32) {
    %c0_i32 = arith.constant 0 : i32
    %c0_i32_0 = arith.constant 0 : i32
    %c0_i32_1 = arith.constant 0 : i32
    return %c0_i32, %c0_i32_0 : i32, i32
  }
  func.func @transform_10(%arg0: i32) -> (i32, i32) {
    %c0_i32 = arith.constant 0 : i32
    %c0_i32_0 = arith.constant 0 : i32
    %c0_i32_1 = arith.constant 0 : i32
    return %c0_i32, %c0_i32_0 : i32, i32
  }
  func.func @transform_11(%arg0: i32) -> (i32, i32) {
    %c0_i32 = arith.constant 0 : i32
    %c0_i32_0 = arith.constant 0 : i32
    %c0_i32_1 = arith.constant 0 : i32
    return %c0_i32, %c0_i32_0 : i32, i32
  }
  func.func @transform_12(%arg0: i32) -> (i32, i32, i32, i32) {
    %c0_i32 = arith.constant 0 : i32
    %c0_i32_0 = arith.constant 0 : i32
    %c0_i32_1 = arith.constant 0 : i32
    %c0_i32_2 = arith.constant 0 : i32
    return %arg0, %c0_i32, %c0_i32_0, %c0_i32_1 : i32, i32, i32, i32
  }
}

</mosaic_0001>

<llo_original>
// kernel: tpu_custom_call.1
$region0: #{tpu_custom_call.1}
  #allocation0 [shape = 'u32[]', space=smem, size = 0x4, offset = 0x4, fixed_abs, tag = 'smem constant byte address 0x4 - core index']
  #allocation1 [shape = 'u32[72,128]{1,0:T(1,128)}', space=vmem, size = 0x9000, scoped, tag = 'internal scratch']
  %s0 = inlined_call_operand.vmem [shape: f32[2,10,10,16], index: 0, kind: input, shape index: {}]
  %s1 = inlined_call_operand.vmem [shape: bf16[16,4], index: 1, kind: input, shape index: {}]
  %s2 = inlined_call_operand.vmem [shape: f32[1,4], index: 2, kind: input, shape index: {}]
  %s3 = inlined_call_operand.vmem [shape: f32[1,4], index: 3, kind: input, shape index: {}]
  %s4 = inlined_call_operand.vmem [shape: bf16[4,144], index: 4, kind: input, shape index: {}]
  %s5 = inlined_call_operand.vmem [shape: f32[1,144], index: 5, kind: input, shape index: {}]
  %s6 = inlined_call_operand.vmem [shape: f32[1,16], index: 6, kind: input, shape index: {}]
  %s7 = inlined_call_operand.vmem [shape: f32[1,16], index: 7, kind: input, shape index: {}]
  %s8 = inlined_call_operand.vmem [shape: bf16[16,64], index: 8, kind: input, shape index: {}]
  %s9 = inlined_call_operand.vmem [shape: f32[1,64], index: 9, kind: input, shape index: {}]
  %s10 = inlined_call_operand.vmem [shape: bf16[64,16], index: 10, kind: input, shape index: {}]
  %s11 = inlined_call_operand.vmem [shape: f32[1,16], index: 11, kind: input, shape index: {}]
  %s12 = inlined_call_operand.hbm [shape: f32[2,8,8,16], index: 12, kind: output, shape index: {}]
  %s13 = sld [smem:[#allocation0]]
  $region81: #{tpu_custom_call.1} parent=0
    _
  %s15 = ssub.s32 1, %s13
  %s16 = scalar_select 0, %s15, %s13
  $region1: #{tpu_custom_call.1} parent=0
    #allocation2 [shape = 'u8[65536]{0}', space=vmem, size = 0x10000, scoped, tag = 'output window, operand 0']
    #allocation3 [shape = 's32[2]{0}', space=sflag, size = 0x8, scoped, tag = 'scoped memory for tpu_custom_call.1']
    %17 = vsyncpa [#allocation3], 0
    %s18 = scalar_lea.sflag [#allocation3], 1
    %19 = vsyncpa %s18, 0
    loop: start=0, step=1, limit=4
    $region2: #{tpu_custom_call.1} parent=1 // loop_pre_header
      _
    $region3: #{tpu_custom_call.1} parent=1 // loop_header
      %s21 = sphi 0, %s25
      %p22 = scmp.ge.s32.totalorder %s21, 4
      %s31 = sphi 0, %s33
      %s34 = sphi 0, %s31
      %s35 = sphi 0, %s34
      %s51 = sphi 0, %s35
      %s55 = sphi 0, %s55
      %s57 = sphi 0, %s55
      %s58 = sphi 0, %s57
      %s72 = sphi 0, %s58
      %s76 = sphi 0, %s76
      %s78 = sphi 0, %s76
      %s79 = sphi 0, %s78
      %s93 = sphi 0, %s79
      %s97 = sphi 0, %s97
      %s99 = sphi 0, %s97
      %s100 = sphi 0, %s99
      %s114 = sphi 0, %s100
      %s118 = sphi 0, %s118
      %s120 = sphi 0, %s118
      %s121 = sphi 0, %s120
      %s135 = sphi 0, %s121
      %s139 = sphi 0, %s139
      %s141 = sphi 0, %s139
      %s142 = sphi 0, %s141
      %s156 = sphi 0, %s142
      %s160 = sphi 0, %s160
      %s162 = sphi 0, %s160
      %s163 = sphi 0, %s162
      %s177 = sphi 0, %s163
      %s181 = sphi 0, %s181
      %s183 = sphi 0, %s181
      %s184 = sphi 0, %s183
      %s198 = sphi 0, %s184
      %s202 = sphi 0, %s202
      %s204 = sphi 0, %s202
      %s205 = sphi 0, %s204
      %s219 = sphi 0, %s205
      %s223 = sphi 0, %s223
      %s225 = sphi 0, %s223
      %s226 = sphi 0, %s225
      %s240 = sphi 0, %s226
      %s244 = sphi 0, %s244
      %s246 = sphi 0, %s244
      %s247 = sphi 0, %s246
      %s261 = sphi 0, %s247
      %s265 = sphi 0, %s265
      %s267 = sphi 0, %s265
      %s268 = sphi 0, %s267
      %s282 = sphi 0, %s268
      %s288 = sphi 0, %s290
      %s291 = sphi 0, %s288
      %s292 = sphi 0, %s291
      %s308 = sphi 0, %s292
    $region4: #{tpu_custom_call.1} parent=1 // loop_header_branch
      %24 = sbr.rel (%p22) target = $region8
    $region5: #{tpu_custom_call.1} parent=1 // loop_body
      %s26 = ssub.s32 %s21, 1
      %s27 = ssub.s32 %s21, 2
      %s28 = sadd.s32 %s21, 1
      %s29 = ssub.s32 %s21, %s28
      %p30 = scmp.eq.s32.totalorder %s29, 0
      %s32 = sadd.s32 %s31, 1
      %s33 = scalar_select %p30, %s31, %s32
      %p36 = pneg %p30
      %p37 = scmp.eq.s32.totalorder %s21, 1
      %p38 = por %p36, %p37
      %p39 = scmp.ne.s32.totalorder %s31, %s34
      %p40 = scmp.eq.s32.totalorder %s21, 0
      %p41 = por %p39, %p40
      %p42 = scmp.ne.s32.totalorder %s31, %s34
      %p43 = scmp.eq.s32.totalorder %s26, 1
      %p44 = por %p42, %p43
      %p45 = scmp.ne.s32.totalorder %s34, %s35
      %p46 = scmp.eq.s32.totalorder %s26, 0
      %p47 = por %p45, %p46
      %p48 = scmp.ne.s32.totalorder %s34, %s35
      %p49 = scmp.eq.s32.totalorder %s27, 1
      %p50 = por %p48, %p49
      %p52 = scmp.ne.s32.totalorder %s35, %s51
      %p53 = scmp.eq.s32.totalorder %s27, 0
      %p54 = por %p52, %p53
      %s56 = sadd.s32 %s55, 1
      %p59 = scmp.eq.s32.totalorder %s21, 1
      %p60 = scmp.ne.s32.totalorder %s55, %s57
      %p61 = scmp.eq.s32.totalorder %s21, 0
      %p62 = por %p60, %p61
      %p63 = scmp.ne.s32.totalorder %s55, %s57
      %p64 = scmp.eq.s32.totalorder %s26, 1
      %p65 = por %p63, %p64
      %p66 = scmp.ne.s32.totalorder %s57, %s58
      %p67 = scmp.eq.s32.totalorder %s26, 0
      %p68 = por %p66, %p67
      %p69 = scmp.ne.s32.totalorder %s57, %s58
      %p70 = scmp.eq.s32.totalorder %s27, 1
      %p71 = por %p69, %p70
      %p73 = scmp.ne.s32.totalorder %s58, %s72
      %p74 = scmp.eq.s32.totalorder %s27, 0
      %p75 = por %p73, %p74
      %s77 = sadd.s32 %s76, 1
      %p80 = scmp.eq.s32.totalorder %s21, 1
      %p81 = scmp.ne.s32.totalorder %s76, %s78
      %p82 = scmp.eq.s32.totalorder %s21, 0
      %p83 = por %p81, %p82
      %p84 = scmp.ne.s32.totalorder %s76, %s78
      %p85 = scmp.eq.s32.totalorder %s26, 1
      %p86 = por %p84, %p85
      %p87 = scmp.ne.s32.totalorder %s78, %s79
      %p88 = scmp.eq.s32.totalorder %s26, 0
      %p89 = por %p87, %p88
      %p90 = scmp.ne.s32.totalorder %s78, %s79
      %p91 = scmp.eq.s32.totalorder %s27, 1
      %p92 = por %p90, %p91
      %p94 = scmp.ne.s32.totalorder %s79, %s93
      %p95 = scmp.eq.s32.totalorder %s27, 0
      %p96 = por %p94, %p95
      %s98 = sadd.s32 %s97, 1
      %p101 = scmp.eq.s32.totalorder %s21, 1
      %p102 = scmp.ne.s32.totalorder %s97, %s99
      %p103 = scmp.eq.s32.totalorder %s21, 0
      %p104 = por %p102, %p103
      %p105 = scmp.ne.s32.totalorder %s97, %s99
      %p106 = scmp.eq.s32.totalorder %s26, 1
      %p107 = por %p105, %p106
      %p108 = scmp.ne.s32.totalorder %s99, %s100
      %p109 = scmp.eq.s32.totalorder %s26, 0
      %p110 = por %p108, %p109
      %p111 = scmp.ne.s32.totalorder %s99, %s100
      %p112 = scmp.eq.s32.totalorder %s27, 1
      %p113 = por %p111, %p112
      %p115 = scmp.ne.s32.totalorder %s100, %s114
      %p116 = scmp.eq.s32.totalorder %s27, 0
      %p117 = por %p115, %p116
      %s119 = sadd.s32 %s118, 1
      %p122 = scmp.eq.s32.totalorder %s21, 1
      %p123 = scmp.ne.s32.totalorder %s118, %s120
      %p124 = scmp.eq.s32.totalorder %s21, 0
      %p125 = por %p123, %p124
      %p126 = scmp.ne.s32.totalorder %s118, %s120
      %p127 = scmp.eq.s32.totalorder %s26, 1
      %p128 = por %p126, %p127
      %p129 = scmp.ne.s32.totalorder %s120, %s121
      %p130 = scmp.eq.s32.totalorder %s26, 0
      %p131 = por %p129, %p130
      %p132 = scmp.ne.s32.totalorder %s120, %s121
      %p133 = scmp.eq.s32.totalorder %s27, 1
      %p134 = por %p132, %p133
      %p136 = scmp.ne.s32.totalorder %s121, %s135
      %p137 = scmp.eq.s32.totalorder %s27, 0
      %p138 = por %p136, %p137
      %s140 = sadd.s32 %s139, 1
      %p143 = scmp.eq.s32.totalorder %s21, 1
      %p144 = scmp.ne.s32.totalorder %s139, %s141
      %p145 = scmp.eq.s32.totalorder %s21, 0
      %p146 = por %p144, %p145
      %p147 = scmp.ne.s32.totalorder %s139, %s141
      %p148 = scmp.eq.s32.totalorder %s26, 1
      %p149 = por %p147, %p148
      %p150 = scmp.ne.s32.totalorder %s141, %s142
      %p151 = scmp.eq.s32.totalorder %s26, 0
      %p152 = por %p150, %p151
      %p153 = scmp.ne.s32.totalorder %s141, %s142
      %p154 = scmp.eq.s32.totalorder %s27, 1
      %p155 = por %p153, %p154
      %p157 = scmp.ne.s32.totalorder %s142, %s156
      %p158 = scmp.eq.s32.totalorder %s27, 0
      %p159 = por %p157, %p158
      %s161 = sadd.s32 %s160, 1
      %p164 = scmp.eq.s32.totalorder %s21, 1
      %p165 = scmp.ne.s32.totalorder %s160, %s162
      %p166 = scmp.eq.s32.totalorder %s21, 0
      %p167 = por %p165, %p166
      %p168 = scmp.ne.s32.totalorder %s160, %s162
      %p169 = scmp.eq.s32.totalorder %s26, 1
      %p170 = por %p168, %p169
      %p171 = scmp.ne.s32.totalorder %s162, %s163
      %p172 = scmp.eq.s32.totalorder %s26, 0
      %p173 = por %p171, %p172
      %p174 = scmp.ne.s32.totalorder %s162, %s163
      %p175 = scmp.eq.s32.totalorder %s27, 1
      %p176 = por %p174, %p175
      %p178 = scmp.ne.s32.totalorder %s163, %s177
      %p179 = scmp.eq.s32.totalorder %s27, 0
      %p180 = por %p178, %p179
      %s182 = sadd.s32 %s181, 1
      %p185 = scmp.eq.s32.totalorder %s21, 1
      %p186 = scmp.ne.s32.totalorder %s181, %s183
      %p187 = scmp.eq.s32.totalorder %s21, 0
      %p188 = por %p186, %p187
      %p189 = scmp.ne.s32.totalorder %s181, %s183
      %p190 = scmp.eq.s32.totalorder %s26, 1
      %p191 = por %p189, %p190
      %p192 = scmp.ne.s32.totalorder %s183, %s184
      %p193 = scmp.eq.s32.totalorder %s26, 0
      %p194 = por %p192, %p193
      %p195 = scmp.ne.s32.totalorder %s183, %s184
      %p196 = scmp.eq.s32.totalorder %s27, 1
      %p197 = por %p195, %p196
      %p199 = scmp.ne.s32.totalorder %s184, %s198
      %p200 = scmp.eq.s32.totalorder %s27, 0
      %p201 = por %p199, %p200
      %s203 = sadd.s32 %s202, 1
      %p206 = scmp.eq.s32.totalorder %s21, 1
      %p207 = scmp.ne.s32.totalorder %s202, %s204
      %p208 = scmp.eq.s32.totalorder %s21, 0
      %p209 = por %p207, %p208
      %p210 = scmp.ne.s32.totalorder %s202, %s204
      %p211 = scmp.eq.s32.totalorder %s26, 1
      %p212 = por %p210, %p211
      %p213 = scmp.ne.s32.totalorder %s204, %s205
      %p214 = scmp.eq.s32.totalorder %s26, 0
      %p215 = por %p213, %p214
      %p216 = scmp.ne.s32.totalorder %s204, %s205
      %p217 = scmp.eq.s32.totalorder %s27, 1
      %p218 = por %p216, %p217
      %p220 = scmp.ne.s32.totalorder %s205, %s219
      %p221 = scmp.eq.s32.totalorder %s27, 0
      %p222 = por %p220, %p221
      %s224 = sadd.s32 %s223, 1
      %p227 = scmp.eq.s32.totalorder %s21, 1
      %p228 = scmp.ne.s32.totalorder %s223, %s225
      %p229 = scmp.eq.s32.totalorder %s21, 0
      %p230 = por %p228, %p229
      %p231 = scmp.ne.s32.totalorder %s223, %s225
      %p232 = scmp.eq.s32.totalorder %s26, 1
      %p233 = por %p231, %p232
      %p234 = scmp.ne.s32.totalorder %s225, %s226
      %p235 = scmp.eq.s32.totalorder %s26, 0
      %p236 = por %p234, %p235
      %p237 = scmp.ne.s32.totalorder %s225, %s226
      %p238 = scmp.eq.s32.totalorder %s27, 1
      %p239 = por %p237, %p238
      %p241 = scmp.ne.s32.totalorder %s226, %s240
      %p242 = scmp.eq.s32.totalorder %s27, 0
      %p243 = por %p241, %p242
      %s245 = sadd.s32 %s244, 1
      %p248 = scmp.eq.s32.totalorder %s21, 1
      %p249 = scmp.ne.s32.totalorder %s244, %s246
      %p250 = scmp.eq.s32.totalorder %s21, 0
      %p251 = por %p249, %p250
      %p252 = scmp.ne.s32.totalorder %s244, %s246
      %p253 = scmp.eq.s32.totalorder %s26, 1
      %p254 = por %p252, %p253
      %p255 = scmp.ne.s32.totalorder %s246, %s247
      %p256 = scmp.eq.s32.totalorder %s26, 0
      %p257 = por %p255, %p256
      %p258 = scmp.ne.s32.totalorder %s246, %s247
      %p259 = scmp.eq.s32.totalorder %s27, 1
      %p260 = por %p258, %p259
      %p262 = scmp.ne.s32.totalorder %s247, %s261
      %p263 = scmp.eq.s32.totalorder %s27, 0
      %p264 = por %p262, %p263
      %s266 = sadd.s32 %s265, 1
      %p269 = scmp.eq.s32.totalorder %s21, 1
      %p270 = scmp.ne.s32.totalorder %s265, %s267
      %p271 = scmp.eq.s32.totalorder %s21, 0
      %p272 = por %p270, %p271
      %p273 = scmp.ne.s32.totalorder %s265, %s267
      %p274 = scmp.eq.s32.totalorder %s26, 1
      %p275 = por %p273, %p274
      %p276 = scmp.ne.s32.totalorder %s267, %s268
      %p277 = scmp.eq.s32.totalorder %s26, 0
      %p278 = por %p276, %p277
      %p279 = scmp.ne.s32.totalorder %s267, %s268
      %p280 = scmp.eq.s32.totalorder %s27, 1
      %p281 = por %p279, %p280
      %p283 = scmp.ne.s32.totalorder %s268, %s282
      %p284 = scmp.eq.s32.totalorder %s27, 0
      %p285 = por %p283, %p284
      %s286 = ssub.s32 %s21, %s28
      %p287 = scmp.eq.s32.totalorder %s286, 0
      %s289 = sadd.s32 %s288, 1
      %s290 = scalar_select %p287, %s288, %s289
      %p293 = pneg %p287
      %p294 = scmp.eq.s32.totalorder %s21, 1
      %p295 = por %p293, %p294
      %p296 = scmp.ne.s32.totalorder %s288, %s291
      %p297 = scmp.eq.s32.totalorder %s21, 0
      %p298 = por %p296, %p297
      %p299 = scmp.ne.s32.totalorder %s288, %s291
      %p300 = scmp.eq.s32.totalorder %s26, 1
      %p301 = por %p299, %p300
      %p302 = scmp.ne.s32.totalorder %s291, %s292
      %p303 = scmp.eq.s32.totalorder %s26, 0
      %p304 = por %p302, %p303
      %p305 = scmp.ne.s32.totalorder %s291, %s292
      %p306 = scmp.eq.s32.totalorder %s27, 1
      %p307 = por %p305, %p306
      %p309 = scmp.ne.s32.totalorder %s292, %s308
      %p310 = scmp.eq.s32.totalorder %s27, 0
      %p311 = por %p309, %p310
      %p312 = scmp.le.s32.totalorder 1, %s21
      %p313 = scmp.lt.s32.totalorder %s21, 3
      %p314 = pnand %p312, %p313
      %p315 = pneg %p314
      // Predicated region
      $region9: #{tpu_custom_call.1} parent=5 // pred_check
        _
      $region10: #{tpu_custom_call.1} parent=5 // pred_check_branch
        %317 = sbr.rel (%p314) target = $region12
      $region11: #{tpu_custom_call.1} parent=5 // pred_region
        %s318 = ssub.s32 %s21, 1
        // Predicated region
        $region13: #{tpu_custom_call.1} parent=11 // pred_check
          %p319 = pneg %p68
        $region14: #{tpu_custom_call.1} parent=11 // pred_check_branch
          %321 = sbr.rel (%p319) target = $region16
        $region15: #{tpu_custom_call.1} parent=11 // pred_region
          _
        $region16: #{tpu_custom_call.1} parent=11 // pred_fallthru
          _
        // Predicated region
        $region17: #{tpu_custom_call.1} parent=11 // pred_check
          %p322 = pneg %p89
        $region18: #{tpu_custom_call.1} parent=11 // pred_check_branch
          %324 = sbr.rel (%p322) target = $region20
        $region19: #{tpu_custom_call.1} parent=11 // pred_region
          _
        $region20: #{tpu_custom_call.1} parent=11 // pred_fallthru
          _
        // Predicated region
        $region21: #{tpu_custom_call.1} parent=11 // pred_check
          %p325 = pneg %p110
        $region22: #{tpu_custom_call.1} parent=11 // pred_check_branch
          %327 = sbr.rel (%p325) target = $region24
        $region23: #{tpu_custom_call.1} parent=11 // pred_region
          _
        $region24: #{tpu_custom_call.1} parent=11 // pred_fallthru
          _
        // Predicated region
        $region25: #{tpu_custom_call.1} parent=11 // pred_check
          %p328 = pneg %p131
        $region26: #{tpu_custom_call.1} parent=11 // pred_check_branch
          %330 = sbr.rel (%p328) target = $region28
        $region27: #{tpu_custom_call.1} parent=11 // pred_region
          _
        $region28: #{tpu_custom_call.1} parent=11 // pred_fallthru
          _
        // Predicated region
        $region29: #{tpu_custom_call.1} parent=11 // pred_check
          %p331 = pneg %p152
        $region30: #{tpu_custom_call.1} parent=11 // pred_check_branch
          %333 = sbr.rel (%p331) target = $region32
        $region31: #{tpu_custom_call.1} parent=11 // pred_region
          _
        $region32: #{tpu_custom_call.1} parent=11 // pred_fallthru
          _
        // Predicated region
        $region33: #{tpu_custom_call.1} parent=11 // pred_check
          %p334 = pneg %p173
        $region34: #{tpu_custom_call.1} parent=11 // pred_check_branch
          %336 = sbr.rel (%p334) target = $region36
        $region35: #{tpu_custom_call.1} parent=11 // pred_region
          _
        $region36: #{tpu_custom_call.1} parent=11 // pred_fallthru
          _
        // Predicated region
        $region37: #{tpu_custom_call.1} parent=11 // pred_check
          %p337 = pneg %p194
        $region38: #{tpu_custom_call.1} parent=11 // pred_check_branch
          %339 = sbr.rel (%p337) target = $region40
        $region39: #{tpu_custom_call.1} parent=11 // pred_region
          _
        $region40: #{tpu_custom_call.1} parent=11 // pred_fallthru
          _
        // Predicated region
        $region41: #{tpu_custom_call.1} parent=11 // pred_check
          %p340 = pneg %p215
        $region42: #{tpu_custom_call.1} parent=11 // pred_check_branch
          %342 = sbr.rel (%p340) target = $region44
        $region43: #{tpu_custom_call.1} parent=11 // pred_region
          _
        $region44: #{tpu_custom_call.1} parent=11 // pred_fallthru
          _
        // Predicated region
        $region45: #{tpu_custom_call.1} parent=11 // pred_check
          %p343 = pneg %p236
        $region46: #{tpu_custom_call.1} parent=11 // pred_check_branch
          %345 = sbr.rel (%p343) target = $region48
        $region47: #{tpu_custom_call.1} parent=11 // pred_region
          _
        $region48: #{tpu_custom_call.1} parent=11 // pred_fallthru
          _
        // Predicated region
        $region49: #{tpu_custom_call.1} parent=11 // pred_check
          %p346 = pneg %p257
        $region50: #{tpu_custom_call.1} parent=11 // pred_check_branch
          %348 = sbr.rel (%p346) target = $region52
        $region51: #{tpu_custom_call.1} parent=11 // pred_region
          _
        $region52: #{tpu_custom_call.1} parent=11 // pred_fallthru
          _
        // Predicated region
        $region53: #{tpu_custom_call.1} parent=11 // pred_check
          %p349 = pneg %p278
        $region54: #{tpu_custom_call.1} parent=11 // pred_check_branch
          %351 = sbr.rel (%p349) target = $region56
        $region55: #{tpu_custom_call.1} parent=11 // pred_region
          _
        $region56: #{tpu_custom_call.1} parent=11 // pred_fallthru
          _
      $region12: #{tpu_custom_call.1} parent=5 // pred_fallthru
        _
      %p352 = scmp.lt.s32.totalorder %s21, 2
      // Predicated region
      $region57: #{tpu_custom_call.1} parent=5 // pred_check
        %p353 = pneg %p352
      $region58: #{tpu_custom_call.1} parent=5 // pred_check_branch
        %355 = sbr.rel (%p353) target = $region60
      $region59: #{tpu_custom_call.1} parent=5 // pred_region
        // Predicated region
        $region61: #{tpu_custom_call.1} parent=59 // pred_check
          %p356 = pneg %p41
        $region62: #{tpu_custom_call.1} parent=59 // pred_check_branch
          %358 = sbr.rel (%p356) target = $region64
        $region63: #{tpu_custom_call.1} parent=59 // pred_region
          %p359 = scmp.lt.s32.totalorder %s21, 1
          %s360 = scalar_select %p359, %s21, 1
          %s361 = smul.addr %s360, 20
          %s362 = smul.addr %s361, 8
          %s363 = scalar_lea.vmem %s0, %s362
        $region64: #{tpu_custom_call.1} parent=59 // pred_fallthru
          _
      $region60: #{tpu_custom_call.1} parent=5 // pred_fallthru
        _
      %p364 = scmp.le.s32.totalorder 1, %s21
      %p365 = scmp.lt.s32.totalorder %s21, 3
      %p366 = pnand %p364, %p365
      %p367 = pneg %p366
      // Predicated region
      $region65: #{tpu_custom_call.1} parent=5 // pred_check
        _
      $region66: #{tpu_custom_call.1} parent=5 // pred_check_branch
        %369 = sbr.rel (%p366) target = $region68
      $region67: #{tpu_custom_call.1} parent=5 // pred_region
        %s370 = ssub.s32 %s21, 1
        %p371 = scmp.lt.s32.totalorder %s26, 1
        %s372 = scalar_select %p371, %s26, 1
        %s373 = smul.addr %s372, 20
        %s374 = smul.addr %s373, 8
        %s375 = scalar_lea.vmem %s0, %s374
        %p376 = pneg %p47
        %p377 = pneg %p44
        %p378 = pneg %p68
        %p379 = pneg %p65
        %p380 = pneg %p89
        %p381 = pneg %p86
        %p382 = pneg %p110
        %p383 = pneg %p107
        %p384 = pneg %p131
        %p385 = pneg %p128
        %p386 = pneg %p152
        %p387 = pneg %p149
        %p388 = pneg %p173
        %p389 = pneg %p170
        %p390 = pneg %p194
        %p391 = pneg %p191
        %p392 = pneg %p215
        %p393 = pneg %p212
        %p394 = pneg %p236
        %p395 = pneg %p233
        %p396 = pneg %p257
        %p397 = pneg %p254
        %p398 = pneg %p278
        %p399 = pneg %p275
        %p400 = pneg %p304
        %p401 = pneg %p301
        %s402 = sand.u32 %s291, 1
        %s403 = scalar_lea.sflag [#allocation3], %s402
        %s404 = sand.u32 %s291, 1
        %s405 = smul.addr %s404, 64
        %s406 = scalar_lea.vmem [#allocation2], %s405
        %p407 = scmp.lt.s32.totalorder %s26, 1
        %s408 = scalar_select %p407, %s26, 1
        %s409 = smul.addr %s408, 20
        %s410 = smul.addr %s409, 8
        %s411 = scalar_lea.vmem %s0, %s410
        %s413 = scalar_lea.vmem %s411, 16
        %v414 = vld [vmem:[%s413 + $0x1] sm:$0xff]
        %v415 = vld [vmem:[%s413 + $0x11] sm:$0xff]
        %v416 = vld [vmem:[%s413 + $0x21] sm:$0xff]
        %v417 = vld [vmem:[%s413 + $0x31] sm:$0xff]
        %v418 = vld [vmem:[%s413 + $0x41] sm:$0xff]
        %v419 = vld [vmem:[%s413 + $0x51] sm:$0xff]
        %v420 = vld [vmem:[%s413 + $0x61] sm:$0xff]
        %v421 = vld [vmem:[%s413 + $0x71] sm:$0xff]
        %v422 = vpack.c.bf16 %v415, %v414
        %v423 = vpack.c.bf16 %v417, %v416
        %v424 = vpack.c.bf16 %v419, %v418
        %v425 = vpack.c.bf16 %v421, %v420
        %v426 = vld [vmem:[%s1] sm:$0xf]
        %v427 = vld [vmem:[%s1 + $0x4] sm:$0xf]
        %v430 = vunpack.c.l.b16 %v426
        %v431 = vunpack.c.l.b16 %v427
        %v432 = vpack.c.b16 %v431, %v430
        %vm434 = vcmask 130048
        %v436 = vsel %vm434, %v422, 0
        %v439 = vsel %vm434, %v423, 0
        %v442 = vsel %vm434, %v424, 0
        %v445 = vsel %vm434, %v425, 0
        %447 = vmatpush.bf16.msra.mxu0 0
        %448 = vmatpush.bf16.msra.mxu0 0
        %449 = vmatpush.bf16.msra.mxu0 0
        %450 = vmatpush.bf16.msra.mxu0 0
        %451 = vmatpush.bf16.msra.mxu0 0
        %452 = vmatpush.bf16.msra.mxu0 0
        %453 = vmatpush.bf16.msra.mxu0 0
        %454 = vmatpush.bf16.msra.mxu0 %v432
        %455 = vmatmul.bf16.gmra.mxu0 %v436
        %v456 = vpop.f32.mrf.mxu0
        %v457 = vadd.f32 0.0, %v456
        %v458 = vpop.f32.mrf.mxu0
        %v459 = vadd.f32 0.0, %v458
        %460 = vmatmul.bf16.gmra.mxu0 %v439
        %v461 = vpop.f32.mrf.mxu0
        %v462 = vadd.f32 0.0, %v461
        %v463 = vpop.f32.mrf.mxu0
        %v464 = vadd.f32 0.0, %v463
        %465 = vmatmul.bf16.gmra.mxu0 %v442
        %v466 = vpop.f32.mrf.mxu0
        %v467 = vadd.f32 0.0, %v466
        %v468 = vpop.f32.mrf.mxu0
        %v469 = vadd.f32 0.0, %v468
        %470 = vmatmul.bf16.gmra.mxu0 %v445
        %v471 = vpop.f32.mrf.mxu0
        %v472 = vadd.f32 0.0, %v471
        %v473 = vpop.f32.mrf.mxu0
        %v474 = vadd.f32 0.0, %v473
        %475 = vdwg.mxu0
        %v476 = vld [vmem:[%s2] sm:$0x1]
        %v478 = vperm.slane %v476, 0
        %v480 = vmul.f32 %v457, %v478
        %v481 = vmul.f32 %v459, %v478
        %v482 = vmul.f32 %v462, %v478
        %v483 = vmul.f32 %v464, %v478
        %v484 = vmul.f32 %v467, %v478
        %v485 = vmul.f32 %v469, %v478
        %v486 = vmul.f32 %v472, %v478
        %v487 = vmul.f32 %v474, %v478
        %v488 = vld [vmem:[%s3] sm:$0x1]
        %v490 = vperm.slane %v488, 0
        %v492 = vadd.f32 %v480, %v490
        %v493 = vadd.f32 %v481, %v490
        %v494 = vadd.f32 %v482, %v490
        %v495 = vadd.f32 %v483, %v490
        %v496 = vadd.f32 %v484, %v490
        %v497 = vadd.f32 %v485, %v490
        %v498 = vadd.f32 %v486, %v490
        %v499 = vadd.f32 %v487, %v490
        %v500 = vmax.f32 %v492, 0.0
        %v501 = vmax.f32 %v493, 0.0
        %v502 = vmax.f32 %v494, 0.0
        %v503 = vmax.f32 %v495, 0.0
        %v504 = vmax.f32 %v496, 0.0
        %v505 = vmax.f32 %v497, 0.0
        %v506 = vmax.f32 %v498, 0.0
        %v507 = vmax.f32 %v499, 0.0
        %v508 = vpack.c.bf16 %v501, %v500
        %v509 = vpack.c.bf16 %v503, %v502
        %v510 = vpack.c.bf16 %v505, %v504
        %v511 = vpack.c.bf16 %v507, %v506
        %v512 = vld [vmem:[%s4] sm:$0xf]
        %v513 = vld [vmem:[%s5] sm:$0x3]
        %v515 = vperm.slane %v513, 0
        %v516 = vperm.slane %v513, 1
        %520 = vst [vmem:[#allocation1] ss:$4 sm:$0xff] %v512
        %v521 = vld.sshfl [vmem:[#allocation1] sm:$0xff pattern:$0x73625140]
        %v522 = vld.sshfl [vmem:[#allocation1 + $0x8] sm:$0xff pattern:$0x73625140]
        %vm523 = vcmask 31744
        %v525 = vsel %vm523, %v508, 0
        %v528 = vsel %vm523, %v509, 0
        %v531 = vsel %vm523, %v510, 0
        %v534 = vsel %vm523, %v511, 0
        %vm536 = vcmask 1041408
        %v537 = vsel %vm536, %v521, 0
        %v539 = vsel %vm536, %v522, 0
        %541 = vmatpush.bf16.msra.mxu0 0
        %542 = vmatpush.bf16.msra.mxu0 0
        %543 = vmatpush.bf16.msra.mxu0 0
        %544 = vmatpush.bf16.msra.mxu0 0
        %545 = vmatpush.bf16.msra.mxu0 0
        %546 = vmatpush.bf16.msra.mxu0 0
        %547 = vmatpush.bf16.msra.mxu0 0
        %548 = vmatpush.bf16.msra.mxu0 %v537
        %549 = vmatmul.bf16.gmra.mxu0 %v525
        %v550 = vpop.f32.mrf.mxu0
        %v551 = vadd.f32 %v515, %v550
        %v552 = vpop.f32.mrf.mxu0
        %v553 = vadd.f32 %v515, %v552
        %554 = vmatmul.bf16.gmra.mxu0 %v528
        %v555 = vpop.f32.mrf.mxu0
        %v556 = vadd.f32 %v515, %v555
        %v557 = vpop.f32.mrf.mxu0
        %v558 = vadd.f32 %v515, %v557
        %559 = vmatmul.bf16.gmra.mxu0 %v531
        %v560 = vpop.f32.mrf.mxu0
        %v561 = vadd.f32 %v515, %v560
        %v562 = vpop.f32.mrf.mxu0
        %v563 = vadd.f32 %v515, %v562
        %564 = vmatmul.bf16.gmra.mxu0 %v534
        %v565 = vpop.f32.mrf.mxu0
        %v566 = vadd.f32 %v515, %v565
        %v567 = vpop.f32.mrf.mxu0
        %v568 = vadd.f32 %v515, %v567
        %569 = vdwg.mxu0
        %570 = vmatpush.bf16.msra.mxu0 0
        %571 = vmatpush.bf16.msra.mxu0 0
        %572 = vmatpush.bf16.msra.mxu0 0
        %573 = vmatpush.bf16.msra.mxu0 0
        %574 = vmatpush.bf16.msra.mxu0 0
        %575 = vmatpush.bf16.msra.mxu0 0
        %576 = vmatpush.bf16.msra.mxu0 0
        %577 = vmatpush.bf16.msra.mxu0 %v539
        %578 = vmatmul.bf16.gmra.mxu0 %v525
        %v579 = vpop.f32.mrf.mxu0
        %v580 = vadd.f32 %v516, %v579
        %v581 = vpop.f32.mrf.mxu0
        %v582 = vadd.f32 %v516, %v581
        %583 = vmatmul.bf16.gmra.mxu0 %v528
        %v584 = vpop.f32.mrf.mxu0
        %v585 = vadd.f32 %v516, %v584
        %v586 = vpop.f32.mrf.mxu0
        %v587 = vadd.f32 %v516, %v586
        %588 = vmatmul.bf16.gmra.mxu0 %v531
        %v589 = vpop.f32.mrf.mxu0
        %v590 = vadd.f32 %v516, %v589
        %v591 = vpop.f32.mrf.mxu0
        %v592 = vadd.f32 %v516, %v591
        %593 = vmatmul.bf16.gmra.mxu0 %v534
        %v594 = vpop.f32.mrf.mxu0
        %v595 = vadd.f32 %v516, %v594
        %v596 = vpop.f32.mrf.mxu0
        %v597 = vadd.f32 %v516, %v596
        %598 = vdwg.mxu0
        %v599 = vld [vmem:[%s411] sm:$0xff]
        %v600 = vld [vmem:[%s411 + $0x10] sm:$0xff]
        %v601 = vld [vmem:[%s411 + $0x20] sm:$0xff]
        %v602 = vld [vmem:[%s411 + $0x30] sm:$0xff]
        %v603 = vld [vmem:[%s411 + $0x40] sm:$0xff]
        %v604 = vld [vmem:[%s411 + $0x50] sm:$0xff]
        %v605 = vld [vmem:[%s411 + $0x60] sm:$0xff]
        %v606 = vld [vmem:[%s411 + $0x70] sm:$0xff]
        %v607 = vmul.f32 %v599, %v551
        %v608 = vmul.f32 %v600, %v553
        %v609 = vmul.f32 %v601, %v556
        %v610 = vmul.f32 %v602, %v558
        %v611 = vmul.f32 %v603, %v561
        %v612 = vmul.f32 %v604, %v563
        %v613 = vmul.f32 %v605, %v566
        %v614 = vmul.f32 %v606, %v568
        %v615 = vadd.f32 %v607, 0.0
        %v616 = vadd.f32 %v608, 0.0
        %v617 = vadd.f32 %v609, 0.0
        %v618 = vadd.f32 %v610, 0.0
        %v619 = vadd.f32 %v611, 0.0
        %v620 = vadd.f32 %v612, 0.0
        %v621 = vadd.f32 %v613, 0.0
        %v622 = vadd.f32 %v614, 0.0
        %v623 = vld [vmem:[%s411 + $0x1] sm:$0xff]
        %v624 = vld [vmem:[%s411 + $0x11] sm:$0xff]
        %v625 = vld [vmem:[%s411 + $0x21] sm:$0xff]
        %v626 = vld [vmem:[%s411 + $0x31] sm:$0xff]
        %v627 = vld [vmem:[%s411 + $0x41] sm:$0xff]
        %v628 = vld [vmem:[%s411 + $0x51] sm:$0xff]
        %v629 = vld [vmem:[%s411 + $0x61] sm:$0xff]
        %v630 = vld [vmem:[%s411 + $0x71] sm:$0xff]
        %639 = vrot.lane.b32.xlu0 %v551, 112
        %v640 = vpop.permute.xlu0 %639
        %641 = vrot.lane.b32.xlu0 %v553, 112
        %v642 = vpop.permute.xlu0 %641
        %643 = vrot.lane.b32.xlu0 %v556, 112
        %v644 = vpop.permute.xlu0 %643
        %645 = vrot.lane.b32.xlu0 %v558, 112
        %v646 = vpop.permute.xlu0 %645
        %647 = vrot.lane.b32.xlu0 %v561, 112
        %v648 = vpop.permute.xlu0 %647
        %649 = vrot.lane.b32.xlu0 %v563, 112
        %v650 = vpop.permute.xlu0 %649
        %651 = vrot.lane.b32.xlu0 %v566, 112
        %v652 = vpop.permute.xlu0 %651
        %653 = vrot.lane.b32.xlu0 %v568, 112
        %v654 = vpop.permute.xlu0 %653
        %v663 = vmul.f32 %v623, %v640
        %v664 = vmul.f32 %v624, %v642
        %v665 = vmul.f32 %v625, %v644
        %v666 = vmul.f32 %v626, %v646
        %v667 = vmul.f32 %v627, %v648
        %v668 = vmul.f32 %v628, %v650
        %v669 = vmul.f32 %v629, %v652
        %v670 = vmul.f32 %v630, %v654
        %v671 = vadd.f32 %v615, %v663
        %v672 = vadd.f32 %v616, %v664
        %v673 = vadd.f32 %v617, %v665
        %v674 = vadd.f32 %v618, %v666
        %v675 = vadd.f32 %v619, %v667
        %v676 = vadd.f32 %v620, %v668
        %v677 = vadd.f32 %v621, %v669
        %v678 = vadd.f32 %v622, %v670
        %v679 = vld [vmem:[%s411 + $0x2] sm:$0xff]
        %v680 = vld [vmem:[%s411 + $0x12] sm:$0xff]
        %v681 = vld [vmem:[%s411 + $0x22] sm:$0xff]
        %v682 = vld [vmem:[%s411 + $0x32] sm:$0xff]
        %v683 = vld [vmem:[%s411 + $0x42] sm:$0xff]
        %v684 = vld [vmem:[%s411 + $0x52] sm:$0xff]
        %v685 = vld [vmem:[%s411 + $0x62] sm:$0xff]
        %v686 = vld [vmem:[%s411 + $0x72] sm:$0xff]
        %687 = vrot.lane.b32.xlu0 %v551, 96
        %v688 = vpop.permute.xlu0 %687
        %689 = vrot.lane.b32.xlu0 %v553, 96
        %v690 = vpop.permute.xlu0 %689
        %691 = vrot.lane.b32.xlu0 %v556, 96
        %v692 = vpop.permute.xlu0 %691
        %693 = vrot.lane.b32.xlu0 %v558, 96
        %v694 = vpop.permute.xlu0 %693
        %695 = vrot.lane.b32.xlu0 %v561, 96
        %v696 = vpop.permute.xlu0 %695
        %697 = vrot.lane.b32.xlu0 %v563, 96
        %v698 = vpop.permute.xlu0 %697
        %699 = vrot.lane.b32.xlu0 %v566, 96
        %v700 = vpop.permute.xlu0 %699
        %701 = vrot.lane.b32.xlu0 %v568, 96
        %v702 = vpop.permute.xlu0 %701
        %v711 = vmul.f32 %v679, %v688
        %v712 = vmul.f32 %v680, %v690
        %v713 = vmul.f32 %v681, %v692
        %v714 = vmul.f32 %v682, %v694
        %v715 = vmul.f32 %v683, %v696
        %v716 = vmul.f32 %v684, %v698
        %v717 = vmul.f32 %v685, %v700
        %v718 = vmul.f32 %v686, %v702
        %v719 = vadd.f32 %v671, %v711
        %v720 = vadd.f32 %v672, %v712
        %v721 = vadd.f32 %v673, %v713
        %v722 = vadd.f32 %v674, %v714
        %v723 = vadd.f32 %v675, %v715
        %v724 = vadd.f32 %v676, %v716
        %v725 = vadd.f32 %v677, %v717
        %v726 = vadd.f32 %v678, %v718
        %v727 = vld [vmem:[%s413] sm:$0xff]
        %v728 = vld [vmem:[%s413 + $0x10] sm:$0xff]
        %v729 = vld [vmem:[%s413 + $0x20] sm:$0xff]
        %v730 = vld [vmem:[%s413 + $0x30] sm:$0xff]
        %v731 = vld [vmem:[%s413 + $0x40] sm:$0xff]
        %v732 = vld [vmem:[%s413 + $0x50] sm:$0xff]
        %v733 = vld [vmem:[%s413 + $0x60] sm:$0xff]
        %v734 = vld [vmem:[%s413 + $0x70] sm:$0xff]
        %735 = vrot.lane.b32.xlu0 %v551, 80
        %v736 = vpop.permute.xlu0 %735
        %737 = vrot.lane.b32.xlu0 %v553, 80
        %v738 = vpop.permute.xlu0 %737
        %739 = vrot.lane.b32.xlu0 %v556, 80
        %v740 = vpop.permute.xlu0 %739
        %741 = vrot.lane.b32.xlu0 %v558, 80
        %v742 = vpop.permute.xlu0 %741
        %743 = vrot.lane.b32.xlu0 %v561, 80
        %v744 = vpop.permute.xlu0 %743
        %745 = vrot.lane.b32.xlu0 %v563, 80
        %v746 = vpop.permute.xlu0 %745
        %747 = vrot.lane.b32.xlu0 %v566, 80
        %v748 = vpop.permute.xlu0 %747
        %749 = vrot.lane.b32.xlu0 %v568, 80
        %v750 = vpop.permute.xlu0 %749
        %v759 = vmul.f32 %v727, %v736
        %v760 = vmul.f32 %v728, %v738
        %v761 = vmul.f32 %v729, %v740
        %v762 = vmul.f32 %v730, %v742
        %v763 = vmul.f32 %v731, %v744
        %v764 = vmul.f32 %v732, %v746
        %v765 = vmul.f32 %v733, %v748
        %v766 = vmul.f32 %v734, %v750
        %v767 = vadd.f32 %v719, %v759
        %v768 = vadd.f32 %v720, %v760
        %v769 = vadd.f32 %v721, %v761
        %v770 = vadd.f32 %v722, %v762
        %v771 = vadd.f32 %v723, %v763
        %v772 = vadd.f32 %v724, %v764
        %v773 = vadd.f32 %v725, %v765
        %v774 = vadd.f32 %v726, %v766
        %775 = vrot.lane.b32.xlu0 %v551, 64
        %v776 = vpop.permute.xlu0 %775
        %777 = vrot.lane.b32.xlu0 %v553, 64
        %v778 = vpop.permute.xlu0 %777
        %779 = vrot.lane.b32.xlu0 %v556, 64
        %v780 = vpop.permute.xlu0 %779
        %781 = vrot.lane.b32.xlu0 %v558, 64
        %v782 = vpop.permute.xlu0 %781
        %783 = vrot.lane.b32.xlu0 %v561, 64
        %v784 = vpop.permute.xlu0 %783
        %785 = vrot.lane.b32.xlu0 %v563, 64
        %v786 = vpop.permute.xlu0 %785
        %787 = vrot.lane.b32.xlu0 %v566, 64
        %v788 = vpop.permute.xlu0 %787
        %789 = vrot.lane.b32.xlu0 %v568, 64
        %v790 = vpop.permute.xlu0 %789
        %v799 = vmul.f32 %v414, %v776
        %v800 = vmul.f32 %v415, %v778
        %v801 = vmul.f32 %v416, %v780
        %v802 = vmul.f32 %v417, %v782
        %v803 = vmul.f32 %v418, %v784
        %v804 = vmul.f32 %v419, %v786
        %v805 = vmul.f32 %v420, %v788
        %v806 = vmul.f32 %v421, %v790
        %v807 = vadd.f32 %v767, %v799
        %v808 = vadd.f32 %v768, %v800
        %v809 = vadd.f32 %v769, %v801
        %v810 = vadd.f32 %v770, %v802
        %v811 = vadd.f32 %v771, %v803
        %v812 = vadd.f32 %v772, %v804
        %v813 = vadd.f32 %v773, %v805
        %v814 = vadd.f32 %v774, %v806
        %v815 = vld [vmem:[%s413 + $0x2] sm:$0xff]
        %v816 = vld [vmem:[%s413 + $0x12] sm:$0xff]
        %v817 = vld [vmem:[%s413 + $0x22] sm:$0xff]
        %v818 = vld [vmem:[%s413 + $0x32] sm:$0xff]
        %v819 = vld [vmem:[%s413 + $0x42] sm:$0xff]
        %v820 = vld [vmem:[%s413 + $0x52] sm:$0xff]
        %v821 = vld [vmem:[%s413 + $0x62] sm:$0xff]
        %v822 = vld [vmem:[%s413 + $0x72] sm:$0xff]
        %823 = vrot.lane.b32.xlu0 %v551, 48
        %v824 = vpop.permute.xlu0 %823
        %825 = vrot.lane.b32.xlu0 %v553, 48
        %v826 = vpop.permute.xlu0 %825
        %827 = vrot.lane.b32.xlu0 %v556, 48
        %v828 = vpop.permute.xlu0 %827
        %829 = vrot.lane.b32.xlu0 %v558, 48
        %v830 = vpop.permute.xlu0 %829
        %831 = vrot.lane.b32.xlu0 %v561, 48
        %v832 = vpop.permute.xlu0 %831
        %833 = vrot.lane.b32.xlu0 %v563, 48
        %v834 = vpop.permute.xlu0 %833
        %835 = vrot.lane.b32.xlu0 %v566, 48
        %v836 = vpop.permute.xlu0 %835
        %837 = vrot.lane.b32.xlu0 %v568, 48
        %v838 = vpop.permute.xlu0 %837
        %v847 = vmul.f32 %v815, %v824
        %v848 = vmul.f32 %v816, %v826
        %v849 = vmul.f32 %v817, %v828
        %v850 = vmul.f32 %v818, %v830
        %v851 = vmul.f32 %v819, %v832
        %v852 = vmul.f32 %v820, %v834
        %v853 = vmul.f32 %v821, %v836
        %v854 = vmul.f32 %v822, %v838
        %v855 = vadd.f32 %v807, %v847
        %v856 = vadd.f32 %v808, %v848
        %v857 = vadd.f32 %v809, %v849
        %v858 = vadd.f32 %v810, %v850
        %v859 = vadd.f32 %v811, %v851
        %v860 = vadd.f32 %v812, %v852
        %v861 = vadd.f32 %v813, %v853
        %v862 = vadd.f32 %v814, %v854
        %s863 = scalar_lea.vmem %s411, 32
        %v864 = vld [vmem:[%s863] sm:$0xff]
        %v865 = vld [vmem:[%s863 + $0x10] sm:$0xff]
        %v866 = vld [vmem:[%s863 + $0x20] sm:$0xff]
        %v867 = vld [vmem:[%s863 + $0x30] sm:$0xff]
        %v868 = vld [vmem:[%s863 + $0x40] sm:$0xff]
        %v869 = vld [vmem:[%s863 + $0x50] sm:$0xff]
        %v870 = vld [vmem:[%s863 + $0x60] sm:$0xff]
        %v871 = vld [vmem:[%s863 + $0x70] sm:$0xff]
        %872 = vrot.lane.b32.xlu0 %v551, 32
        %v873 = vpop.permute.xlu0 %872
        %874 = vrot.lane.b32.xlu0 %v553, 32
        %v875 = vpop.permute.xlu0 %874
        %876 = vrot.lane.b32.xlu0 %v556, 32
        %v877 = vpop.permute.xlu0 %876
        %878 = vrot.lane.b32.xlu0 %v558, 32
        %v879 = vpop.permute.xlu0 %878
        %880 = vrot.lane.b32.xlu0 %v561, 32
        %v881 = vpop.permute.xlu0 %880
        %882 = vrot.lane.b32.xlu0 %v563, 32
        %v883 = vpop.permute.xlu0 %882
        %884 = vrot.lane.b32.xlu0 %v566, 32
        %v885 = vpop.permute.xlu0 %884
        %886 = vrot.lane.b32.xlu0 %v568, 32
        %v887 = vpop.permute.xlu0 %886
        %v896 = vmul.f32 %v864, %v873
        %v897 = vmul.f32 %v865, %v875
        %v898 = vmul.f32 %v866, %v877
        %v899 = vmul.f32 %v867, %v879
        %v900 = vmul.f32 %v868, %v881
        %v901 = vmul.f32 %v869, %v883
        %v902 = vmul.f32 %v870, %v885
        %v903 = vmul.f32 %v871, %v887
        %v904 = vadd.f32 %v855, %v896
        %v905 = vadd.f32 %v856, %v897
        %v906 = vadd.f32 %v857, %v898
        %v907 = vadd.f32 %v858, %v899
        %v908 = vadd.f32 %v859, %v900
        %v909 = vadd.f32 %v860, %v901
        %v910 = vadd.f32 %v861, %v902
        %v911 = vadd.f32 %v862, %v903
        %v912 = vld [vmem:[%s863 + $0x1] sm:$0xff]
        %v913 = vld [vmem:[%s863 + $0x11] sm:$0xff]
        %v914 = vld [vmem:[%s863 + $0x21] sm:$0xff]
        %v915 = vld [vmem:[%s863 + $0x31] sm:$0xff]
        %v916 = vld [vmem:[%s863 + $0x41] sm:$0xff]
        %v917 = vld [vmem:[%s863 + $0x51] sm:$0xff]
        %v918 = vld [vmem:[%s863 + $0x61] sm:$0xff]
        %v919 = vld [vmem:[%s863 + $0x71] sm:$0xff]
        %920 = vrot.lane.b32.xlu0 %v551, 16
        %v921 = vpop.permute.xlu0 %920
        %922 = vrot.lane.b32.xlu0 %v553, 16
        %v923 = vpop.permute.xlu0 %922
        %924 = vrot.lane.b32.xlu0 %v556, 16
        %v925 = vpop.permute.xlu0 %924
        %926 = vrot.lane.b32.xlu0 %v558, 16
        %v927 = vpop.permute.xlu0 %926
        %928 = vrot.lane.b32.xlu0 %v561, 16
        %v929 = vpop.permute.xlu0 %928
        %930 = vrot.lane.b32.xlu0 %v563, 16
        %v931 = vpop.permute.xlu0 %930
        %932 = vrot.lane.b32.xlu0 %v566, 16
        %v933 = vpop.permute.xlu0 %932
        %934 = vrot.lane.b32.xlu0 %v568, 16
        %v935 = vpop.permute.xlu0 %934
        %v944 = vmul.f32 %v912, %v921
        %v945 = vmul.f32 %v913, %v923
        %v946 = vmul.f32 %v914, %v925
        %v947 = vmul.f32 %v915, %v927
        %v948 = vmul.f32 %v916, %v929
        %v949 = vmul.f32 %v917, %v931
        %v950 = vmul.f32 %v918, %v933
        %v951 = vmul.f32 %v919, %v935
        %v952 = vadd.f32 %v904, %v944
        %v953 = vadd.f32 %v905, %v945
        %v954 = vadd.f32 %v906, %v946
        %v955 = vadd.f32 %v907, %v947
        %v956 = vadd.f32 %v908, %v948
        %v957 = vadd.f32 %v909, %v949
        %v958 = vadd.f32 %v910, %v950
        %v959 = vadd.f32 %v911, %v951
        %v960 = vld [vmem:[%s863 + $0x2] sm:$0xff]
        %v961 = vld [vmem:[%s863 + $0x12] sm:$0xff]
        %v962 = vld [vmem:[%s863 + $0x22] sm:$0xff]
        %v963 = vld [vmem:[%s863 + $0x32] sm:$0xff]
        %v964 = vld [vmem:[%s863 + $0x42] sm:$0xff]
        %v965 = vld [vmem:[%s863 + $0x52] sm:$0xff]
        %v966 = vld [vmem:[%s863 + $0x62] sm:$0xff]
        %v967 = vld [vmem:[%s863 + $0x72] sm:$0xff]
        %v968 = vmul.f32 %v960, %v580
        %v969 = vmul.f32 %v961, %v582
        %v970 = vmul.f32 %v962, %v585
        %v971 = vmul.f32 %v963, %v587
        %v972 = vmul.f32 %v964, %v590
        %v973 = vmul.f32 %v965, %v592
        %v974 = vmul.f32 %v966, %v595
        %v975 = vmul.f32 %v967, %v597
        %v976 = vadd.f32 %v952, %v968
        %v977 = vadd.f32 %v953, %v969
        %v978 = vadd.f32 %v954, %v970
        %v979 = vadd.f32 %v955, %v971
        %v980 = vadd.f32 %v956, %v972
        %v981 = vadd.f32 %v957, %v973
        %v982 = vadd.f32 %v958, %v974
        %v983 = vadd.f32 %v959, %v975
        %v984 = vsel %vm434, %v976, 0.0
        %985 = vadd.xlane.f32.xlu0 %v984
        %v986 = vpop.xlane.xlu0 %985
        %v987 = vsel %vm434, %v977, 0.0
        %988 = vadd.xlane.f32.xlu0 %v987
        %v989 = vpop.xlane.xlu0 %988
        %v990 = vsel %vm434, %v978, 0.0
        %991 = vadd.xlane.f32.xlu0 %v990
        %v992 = vpop.xlane.xlu0 %991
        %v993 = vsel %vm434, %v979, 0.0
        %994 = vadd.xlane.f32.xlu0 %v993
        %v995 = vpop.xlane.xlu0 %994
        %v996 = vsel %vm434, %v980, 0.0
        %997 = vadd.xlane.f32.xlu0 %v996
        %v998 = vpop.xlane.xlu0 %997
        %v999 = vsel %vm434, %v981, 0.0
        %1000 = vadd.xlane.f32.xlu0 %v999
        %v1001 = vpop.xlane.xlu0 %1000
        %v1002 = vsel %vm434, %v982, 0.0
        %1003 = vadd.xlane.f32.xlu0 %v1002
        %v1004 = vpop.xlane.xlu0 %1003
        %v1005 = vsel %vm434, %v983, 0.0
        %1006 = vadd.xlane.f32.xlu0 %v1005
        %v1007 = vpop.xlane.xlu0 %1006
        %v1008 = vmul.f32 %v976, %v976
        %v1009 = vmul.f32 %v977, %v977
        %v1010 = vmul.f32 %v978, %v978
        %v1011 = vmul.f32 %v979, %v979
        %v1012 = vmul.f32 %v980, %v980
        %v1013 = vmul.f32 %v981, %v981
        %v1014 = vmul.f32 %v982, %v982
        %v1015 = vmul.f32 %v983, %v983
        %v1016 = vsel %vm434, %v1008, 0.0
        %1017 = vadd.xlane.f32.xlu0 %v1016
        %v1018 = vpop.xlane.xlu0 %1017
        %v1019 = vsel %vm434, %v1009, 0.0
        %1020 = vadd.xlane.f32.xlu0 %v1019
        %v1021 = vpop.xlane.xlu0 %1020
        %v1022 = vsel %vm434, %v1010, 0.0
        %1023 = vadd.xlane.f32.xlu0 %v1022
        %v1024 = vpop.xlane.xlu0 %1023
        %v1025 = vsel %vm434, %v1011, 0.0
        %1026 = vadd.xlane.f32.xlu0 %v1025
        %v1027 = vpop.xlane.xlu0 %1026
        %v1028 = vsel %vm434, %v1012, 0.0
        %1029 = vadd.xlane.f32.xlu0 %v1028
        %v1030 = vpop.xlane.xlu0 %1029
        %v1031 = vsel %vm434, %v1013, 0.0
        %1032 = vadd.xlane.f32.xlu0 %v1031
        %v1033 = vpop.xlane.xlu0 %1032
        %v1034 = vsel %vm434, %v1014, 0.0
        %1035 = vadd.xlane.f32.xlu0 %v1034
        %v1036 = vpop.xlane.xlu0 %1035
        %v1037 = vsel %vm434, %v1015, 0.0
        %1038 = vadd.xlane.f32.xlu0 %v1037
        %v1039 = vpop.xlane.xlu0 %1038
        %v1040 = vmul.f32 %v986, 0.0625
        %v1041 = vmul.f32 %v989, 0.0625
        %v1042 = vmul.f32 %v992, 0.0625
        %v1043 = vmul.f32 %v995, 0.0625
        %v1044 = vmul.f32 %v998, 0.0625
        %v1045 = vmul.f32 %v1001, 0.0625
        %v1046 = vmul.f32 %v1004, 0.0625
        %v1047 = vmul.f32 %v1007, 0.0625
        %v1048 = vmul.f32 %v1018, 0.0625
        %v1049 = vmul.f32 %v1021, 0.0625
        %v1050 = vmul.f32 %v1024, 0.0625
        %v1051 = vmul.f32 %v1027, 0.0625
        %v1052 = vmul.f32 %v1030, 0.0625
        %v1053 = vmul.f32 %v1033, 0.0625
        %v1054 = vmul.f32 %v1036, 0.0625
        %v1055 = vmul.f32 %v1039, 0.0625
        %v1056 = vmul.f32 %v1040, %v1040
        %v1057 = vmul.f32 %v1041, %v1041
        %v1058 = vmul.f32 %v1042, %v1042
        %v1059 = vmul.f32 %v1043, %v1043
        %v1060 = vmul.f32 %v1044, %v1044
        %v1061 = vmul.f32 %v1045, %v1045
        %v1062 = vmul.f32 %v1046, %v1046
        %v1063 = vmul.f32 %v1047, %v1047
        %v1064 = vsub.f32 %v1048, %v1056
        %v1065 = vsub.f32 %v1049, %v1057
        %v1066 = vsub.f32 %v1050, %v1058
        %v1067 = vsub.f32 %v1051, %v1059
        %v1068 = vsub.f32 %v1052, %v1060
        %v1069 = vsub.f32 %v1053, %v1061
        %v1070 = vsub.f32 %v1054, %v1062
        %v1071 = vsub.f32 %v1055, %v1063
        %v1072 = vsub.f32 %v976, %v1040
        %v1073 = vsub.f32 %v977, %v1041
        %v1074 = vsub.f32 %v978, %v1042
        %v1075 = vsub.f32 %v979, %v1043
        %v1076 = vsub.f32 %v980, %v1044
        %v1077 = vsub.f32 %v981, %v1045
        %v1078 = vsub.f32 %v982, %v1046
        %v1079 = vsub.f32 %v983, %v1047
        %v1080 = vadd.f32 %v1064, 1e-06
        %v1081 = vadd.f32 %v1065, 1e-06
        %v1082 = vadd.f32 %v1066, 1e-06
        %v1083 = vadd.f32 %v1067, 1e-06
        %v1084 = vadd.f32 %v1068, 1e-06
        %v1085 = vadd.f32 %v1069, 1e-06
        %v1086 = vadd.f32 %v1070, 1e-06
        %v1087 = vadd.f32 %v1071, 1e-06
        %v1088 = vrsqrt.pop %v1080
        %v1089 = vmul.f32 %v1088, %v1080
        %v1090 = vmul.f32 %v1089, %v1088
        %v1091 = vmul.f32 0.5, %v1090
        %v1092 = vsub.f32 1.5, %v1091
        %v1093 = vmul.f32 %v1088, %v1092
        %vm1094 = vweird.f32 %v1080
        %vm1095 = vweird.f32 %v1088
        %vm1096 = vmor %vm1094, %vm1095
        %v1097 = vsel %vm1096, %v1088, %v1093
        %v1098 = vrsqrt.pop %v1081
        %v1099 = vmul.f32 %v1098, %v1081
        %v1100 = vmul.f32 %v1099, %v1098
        %v1101 = vmul.f32 0.5, %v1100
        %v1102 = vsub.f32 1.5, %v1101
        %v1103 = vmul.f32 %v1098, %v1102
        %vm1104 = vweird.f32 %v1081
        %vm1105 = vweird.f32 %v1098
        %vm1106 = vmor %vm1104, %vm1105
        %v1107 = vsel %vm1106, %v1098, %v1103
        %v1108 = vrsqrt.pop %v1082
        %v1109 = vmul.f32 %v1108, %v1082
        %v1110 = vmul.f32 %v1109, %v1108
        %v1111 = vmul.f32 0.5, %v1110
        %v1112 = vsub.f32 1.5, %v1111
        %v1113 = vmul.f32 %v1108, %v1112
        %vm1114 = vweird.f32 %v1082
        %vm1115 = vweird.f32 %v1108
        %vm1116 = vmor %vm1114, %vm1115
        %v1117 = vsel %vm1116, %v1108, %v1113
        %v1118 = vrsqrt.pop %v1083
        %v1119 = vmul.f32 %v1118, %v1083
        %v1120 = vmul.f32 %v1119, %v1118
        %v1121 = vmul.f32 0.5, %v1120
        %v1122 = vsub.f32 1.5, %v1121
        %v1123 = vmul.f32 %v1118, %v1122
        %vm1124 = vweird.f32 %v1083
        %vm1125 = vweird.f32 %v1118
        %vm1126 = vmor %vm1124, %vm1125
        %v1127 = vsel %vm1126, %v1118, %v1123
        %v1128 = vrsqrt.pop %v1084
        %v1129 = vmul.f32 %v1128, %v1084
        %v1130 = vmul.f32 %v1129, %v1128
        %v1131 = vmul.f32 0.5, %v1130
        %v1132 = vsub.f32 1.5, %v1131
        %v1133 = vmul.f32 %v1128, %v1132
        %vm1134 = vweird.f32 %v1084
        %vm1135 = vweird.f32 %v1128
        %vm1136 = vmor %vm1134, %vm1135
        %v1137 = vsel %vm1136, %v1128, %v1133
        %v1138 = vrsqrt.pop %v1085
        %v1139 = vmul.f32 %v1138, %v1085
        %v1140 = vmul.f32 %v1139, %v1138
        %v1141 = vmul.f32 0.5, %v1140
        %v1142 = vsub.f32 1.5, %v1141
        %v1143 = vmul.f32 %v1138, %v1142
        %vm1144 = vweird.f32 %v1085
        %vm1145 = vweird.f32 %v1138
        %vm1146 = vmor %vm1144, %vm1145
        %v1147 = vsel %vm1146, %v1138, %v1143
        %v1148 = vrsqrt.pop %v1086
        %v1149 = vmul.f32 %v1148, %v1086
        %v1150 = vmul.f32 %v1149, %v1148
        %v1151 = vmul.f32 0.5, %v1150
        %v1152 = vsub.f32 1.5, %v1151
        %v1153 = vmul.f32 %v1148, %v1152
        %vm1154 = vweird.f32 %v1086
        %vm1155 = vweird.f32 %v1148
        %vm1156 = vmor %vm1154, %vm1155
        %v1157 = vsel %vm1156, %v1148, %v1153
        %v1158 = vrsqrt.pop %v1087
        %v1159 = vmul.f32 %v1158, %v1087
        %v1160 = vmul.f32 %v1159, %v1158
        %v1161 = vmul.f32 0.5, %v1160
        %v1162 = vsub.f32 1.5, %v1161
        %v1163 = vmul.f32 %v1158, %v1162
        %vm1164 = vweird.f32 %v1087
        %vm1165 = vweird.f32 %v1158
        %vm1166 = vmor %vm1164, %vm1165
        %v1167 = vsel %vm1166, %v1158, %v1163
        %v1168 = vmul.f32 %v1072, %v1097
        %v1169 = vmul.f32 %v1073, %v1107
        %v1170 = vmul.f32 %v1074, %v1117
        %v1171 = vmul.f32 %v1075, %v1127
        %v1172 = vmul.f32 %v1076, %v1137
        %v1173 = vmul.f32 %v1077, %v1147
        %v1174 = vmul.f32 %v1078, %v1157
        %v1175 = vmul.f32 %v1079, %v1167
        %v1176 = vld [vmem:[%s6] sm:$0x1]
        %v1178 = vperm.slane %v1176, 0
        %v1180 = vmul.f32 %v1168, %v1178
        %v1181 = vmul.f32 %v1169, %v1178
        %v1182 = vmul.f32 %v1170, %v1178
        %v1183 = vmul.f32 %v1171, %v1178
        %v1184 = vmul.f32 %v1172, %v1178
        %v1185 = vmul.f32 %v1173, %v1178
        %v1186 = vmul.f32 %v1174, %v1178
        %v1187 = vmul.f32 %v1175, %v1178
        %v1188 = vld [vmem:[%s7] sm:$0x1]
        %v1190 = vperm.slane %v1188, 0
        %v1192 = vadd.f32 %v1180, %v1190
        %v1193 = vadd.f32 %v1181, %v1190
        %v1194 = vadd.f32 %v1182, %v1190
        %v1195 = vadd.f32 %v1183, %v1190
        %v1196 = vadd.f32 %v1184, %v1190
        %v1197 = vadd.f32 %v1185, %v1190
        %v1198 = vadd.f32 %v1186, %v1190
        %v1199 = vadd.f32 %v1187, %v1190
        %v1200 = vpack.c.bf16 %v1193, %v1192
        %v1201 = vpack.c.bf16 %v1195, %v1194
        %v1202 = vpack.c.bf16 %v1197, %v1196
        %v1203 = vpack.c.bf16 %v1199, %v1198
        %v1204 = vld [vmem:[%s8] sm:$0xf]
        %v1205 = vld [vmem:[%s8 + $0x4] sm:$0xf]
        %v1206 = vld [vmem:[%s9] sm:$0x1]
        %v1208 = vperm.slane %v1206, 0
        %v1212 = vunpack.c.l.b16 %v1204
        %v1213 = vunpack.c.l.b16 %v1205
        %v1214 = vpack.c.b16 %v1213, %v1212
        %v1217 = vsel %vm434, %v1200, 0
        %v1220 = vsel %vm434, %v1201, 0
        %v1223 = vsel %vm434, %v1202, 0
        %v1226 = vsel %vm434, %v1203, 0
        %1228 = vmatpush.bf16.msra.mxu0 0
        %1229 = vmatpush.bf16.msra.mxu0 0
        %1230 = vmatpush.bf16.msra.mxu0 0
        %1231 = vmatpush.bf16.msra.mxu0 0
        %1232 = vmatpush.bf16.msra.mxu0 0
        %1233 = vmatpush.bf16.msra.mxu0 0
        %1234 = vmatpush.bf16.msra.mxu0 0
        %1235 = vmatpush.bf16.msra.mxu0 %v1214
        %1236 = vmatmul.bf16.gmra.mxu0 %v1217
        %v1237 = vpop.f32.mrf.mxu0
        %v1238 = vadd.f32 %v1208, %v1237
        %v1239 = vpop.f32.mrf.mxu0
        %v1240 = vadd.f32 %v1208, %v1239
        %1241 = vmatmul.bf16.gmra.mxu0 %v1220
        %v1242 = vpop.f32.mrf.mxu0
        %v1243 = vadd.f32 %v1208, %v1242
        %v1244 = vpop.f32.mrf.mxu0
        %v1245 = vadd.f32 %v1208, %v1244
        %1246 = vmatmul.bf16.gmra.mxu0 %v1223
        %v1247 = vpop.f32.mrf.mxu0
        %v1248 = vadd.f32 %v1208, %v1247
        %v1249 = vpop.f32.mrf.mxu0
        %v1250 = vadd.f32 %v1208, %v1249
        %1251 = vmatmul.bf16.gmra.mxu0 %v1226
        %v1252 = vpop.f32.mrf.mxu0
        %v1253 = vadd.f32 %v1208, %v1252
        %v1254 = vpop.f32.mrf.mxu0
        %v1255 = vadd.f32 %v1208, %v1254
        %1256 = vdwg.mxu0
        %v1257 = vmul.f32 %v1238, 0.5
        %v1258 = vmul.f32 %v1240, 0.5
        %v1259 = vmul.f32 %v1243, 0.5
        %v1260 = vmul.f32 %v1245, 0.5
        %v1261 = vmul.f32 %v1248, 0.5
        %v1262 = vmul.f32 %v1250, 0.5
        %v1263 = vmul.f32 %v1253, 0.5
        %v1264 = vmul.f32 %v1255, 0.5
        %v1265 = vmul.f32 %v1238, 0.044715
        %v1266 = vmul.f32 %v1240, 0.044715
        %v1267 = vmul.f32 %v1243, 0.044715
        %v1268 = vmul.f32 %v1245, 0.044715
        %v1269 = vmul.f32 %v1248, 0.044715
        %v1270 = vmul.f32 %v1250, 0.044715
        %v1271 = vmul.f32 %v1253, 0.044715
        %v1272 = vmul.f32 %v1255, 0.044715
        %v1273 = vmul.f32 %v1265, %v1238
        %v1274 = vmul.f32 %v1266, %v1240
        %v1275 = vmul.f32 %v1267, %v1243
        %v1276 = vmul.f32 %v1268, %v1245
        %v1277 = vmul.f32 %v1269, %v1248
        %v1278 = vmul.f32 %v1270, %v1250
        %v1279 = vmul.f32 %v1271, %v1253
        %v1280 = vmul.f32 %v1272, %v1255
        %v1281 = vmul.f32 %v1273, %v1238
        %v1282 = vmul.f32 %v1274, %v1240
        %v1283 = vmul.f32 %v1275, %v1243
        %v1284 = vmul.f32 %v1276, %v1245
        %v1285 = vmul.f32 %v1277, %v1248
        %v1286 = vmul.f32 %v1278, %v1250
        %v1287 = vmul.f32 %v1279, %v1253
        %v1288 = vmul.f32 %v1280, %v1255
        %v1289 = vadd.f32 %v1238, %v1281
        %v1290 = vadd.f32 %v1240, %v1282
        %v1291 = vadd.f32 %v1243, %v1283
        %v1292 = vadd.f32 %v1245, %v1284
        %v1293 = vadd.f32 %v1248, %v1285
        %v1294 = vadd.f32 %v1250, %v1286
        %v1295 = vadd.f32 %v1253, %v1287
        %v1296 = vadd.f32 %v1255, %v1288
        %v1297 = vmul.f32 %v1289, 0.7978846
        %v1298 = vmul.f32 %v1290, 0.7978846
        %v1299 = vmul.f32 %v1291, 0.7978846
        %v1300 = vmul.f32 %v1292, 0.7978846
        %v1301 = vmul.f32 %v1293, 0.7978846
        %v1302 = vmul.f32 %v1294, 0.7978846
        %v1303 = vmul.f32 %v1295, 0.7978846
        %v1304 = vmul.f32 %v1296, 0.7978846
        %v1305 = vtanh.pop %v1297
        %v1306 = vtanh.pop %v1298
        %v1307 = vtanh.pop %v1299
        %v1308 = vtanh.pop %v1300
        %v1309 = vtanh.pop %v1301
        %v1310 = vtanh.pop %v1302
        %v1311 = vtanh.pop %v1303
        %v1312 = vtanh.pop %v1304
        %v1313 = vadd.f32 %v1305, 1.0
        %v1314 = vadd.f32 %v1306, 1.0
        %v1315 = vadd.f32 %v1307, 1.0
        %v1316 = vadd.f32 %v1308, 1.0
        %v1317 = vadd.f32 %v1309, 1.0
        %v1318 = vadd.f32 %v1310, 1.0
        %v1319 = vadd.f32 %v1311, 1.0
        %v1320 = vadd.f32 %v1312, 1.0
        %v1321 = vmul.f32 %v1257, %v1313
        %v1322 = vmul.f32 %v1258, %v1314
        %v1323 = vmul.f32 %v1259, %v1315
        %v1324 = vmul.f32 %v1260, %v1316
        %v1325 = vmul.f32 %v1261, %v1317
        %v1326 = vmul.f32 %v1262, %v1318
        %v1327 = vmul.f32 %v1263, %v1319
        %v1328 = vmul.f32 %v1264, %v1320
        %v1329 = vpack.c.bf16 %v1322, %v1321
        %v1330 = vpack.c.bf16 %v1324, %v1323
        %v1331 = vpack.c.bf16 %v1326, %v1325
        %v1332 = vpack.c.bf16 %v1328, %v1327
        %v1333 = vld [vmem:[%s10] sm:$0xf]
        %v1334 = vld [vmem:[%s10 + $0x4] sm:$0xf]
        %v1335 = vld [vmem:[%s10 + $0x8] sm:$0xf]
        %v1336 = vld [vmem:[%s10 + $0xc] sm:$0xf]
        %v1337 = vld [vmem:[%s10 + $0x10] sm:$0xf]
        %v1338 = vld [vmem:[%s10 + $0x14] sm:$0xf]
        %v1339 = vld [vmem:[%s10 + $0x18] sm:$0xf]
        %v1340 = vld [vmem:[%s10 + $0x1c] sm:$0xf]
        %v1341 = vld [vmem:[%s11] sm:$0x1]
        %v1343 = vperm.slane %v1341, 0
        %v1353 = vunpack.c.l.b16 %v1333
        %v1354 = vunpack.c.l.b16 %v1334
        %v1355 = vunpack.c.l.b16 %v1335
        %v1356 = vunpack.c.l.b16 %v1336
        %v1357 = vunpack.c.l.b16 %v1337
        %v1358 = vunpack.c.l.b16 %v1338
        %v1359 = vunpack.c.l.b16 %v1339
        %v1360 = vunpack.c.l.b16 %v1340
        %v1361 = vpack.c.b16 %v1354, %v1353
        %v1362 = vpack.c.b16 %v1356, %v1355
        %v1363 = vpack.c.b16 %v1358, %v1357
        %v1364 = vpack.c.b16 %v1360, %v1359
        %vm1369 = vcmask 523264
        %v1371 = vsel %vm1369, %v1329, 0
        %v1374 = vsel %vm1369, %v1330, 0
        %v1377 = vsel %vm1369, %v1331, 0
        %v1380 = vsel %vm1369, %v1332, 0
        %1382 = vmatpush.bf16.msra.mxu0 0
        %1383 = vmatpush.bf16.msra.mxu0 0
        %1384 = vmatpush.bf16.msra.mxu0 0
        %1385 = vmatpush.bf16.msra.mxu0 0
        %1386 = vmatpush.bf16.msra.mxu0 %v1364
        %1387 = vmatpush.bf16.msra.mxu0 %v1363
        %1388 = vmatpush.bf16.msra.mxu0 %v1362
        %1389 = vmatpush.bf16.msra.mxu0 %v1361
        %1390 = vmatmul.bf16.gmra.mxu0 %v1371
        %v1391 = vpop.f32.mrf.mxu0
        %v1392 = vadd.f32 %v1343, %v1391
        %v1393 = vpop.f32.mrf.mxu0
        %v1394 = vadd.f32 %v1343, %v1393
        %1395 = vmatmul.bf16.gmra.mxu0 %v1374
        %v1396 = vpop.f32.mrf.mxu0
        %v1397 = vadd.f32 %v1343, %v1396
        %v1398 = vpop.f32.mrf.mxu0
        %v1399 = vadd.f32 %v1343, %v1398
        %1400 = vmatmul.bf16.gmra.mxu0 %v1377
        %v1401 = vpop.f32.mrf.mxu0
        %v1402 = vadd.f32 %v1343, %v1401
        %v1403 = vpop.f32.mrf.mxu0
        %v1404 = vadd.f32 %v1343, %v1403
        %1405 = vmatmul.bf16.gmra.mxu0 %v1380
        %v1406 = vpop.f32.mrf.mxu0
        %v1407 = vadd.f32 %v1343, %v1406
        %v1408 = vpop.f32.mrf.mxu0
        %v1409 = vadd.f32 %v1343, %v1408
        %1410 = vdwg.mxu0
        %v1411 = vadd.f32 %v414, %v1392
        %v1412 = vadd.f32 %v415, %v1394
        %v1413 = vadd.f32 %v416, %v1397
        %v1414 = vadd.f32 %v417, %v1399
        %v1415 = vadd.f32 %v418, %v1402
        %v1416 = vadd.f32 %v419, %v1404
        %v1417 = vadd.f32 %v420, %v1407
        %v1418 = vadd.f32 %v421, %v1409
        %1419 = vst.msk [vmem:[%s406] sm:$0xff] %vm434, %v1411
        %1420 = vst.msk [vmem:[%s406 + $0x8] sm:$0xff] %vm434, %v1412
        %1421 = vst.msk [vmem:[%s406 + $0x10] sm:$0xff] %vm434, %v1413
        %1422 = vst.msk [vmem:[%s406 + $0x18] sm:$0xff] %vm434, %v1414
        %1423 = vst.msk [vmem:[%s406 + $0x20] sm:$0xff] %vm434, %v1415
        %1424 = vst.msk [vmem:[%s406 + $0x28] sm:$0xff] %vm434, %v1416
        %1425 = vst.msk [vmem:[%s406 + $0x30] sm:$0xff] %vm434, %v1417
        %1426 = vst.msk [vmem:[%s406 + $0x38] sm:$0xff] %vm434, %v1418
        %s1427 = sand.u32 %s291, 1
        %s1428 = scalar_lea.sflag [#allocation3], %s1427
        %s1429 = sand.u32 %s291, 1
        %s1430 = smul.addr %s1429, 64
        %s1431 = scalar_lea.vmem [#allocation2], %s1430
        // Predicated region
        $region69: #{tpu_custom_call.1} parent=67 // pred_check
          %p1432 = pneg %p301
        $region70: #{tpu_custom_call.1} parent=67 // pred_check_branch
          %1434 = sbr.rel (%p1432) target = $region72
        $region71: #{tpu_custom_call.1} parent=67 // pred_region
          %1436 = vsyncadd %s1428, 0
          %s1437 = smul.addr %s26, 8
          %s1438 = smul.addr %s1437, 8
          %s1439 = scalar_lea.hbm %s12, %s1438
          %s1440 = sshll.u32 %s1431, 4
          %s1441 = int_to_ptr.vmem [resolvable:$true] %s1440
          %s1442 = sshll.u32 %s1439, 4
          %s1443 = int_to_ptr.hbm [resolvable:$true] %s1442
          %1448 = dma.vmem_to_hbm [thread:$0]  %s1441, 1024, %s1443, %s1428, 128, 128, 8
        $region72: #{tpu_custom_call.1} parent=67 // pred_fallthru
          _
      $region68: #{tpu_custom_call.1} parent=5 // pred_fallthru
        _
      %p1449 = scmp.le.s32.totalorder 2, %s21
      // Predicated region
      $region73: #{tpu_custom_call.1} parent=5 // pred_check
        %p1450 = pneg %p1449
      $region74: #{tpu_custom_call.1} parent=5 // pred_check_branch
        %1452 = sbr.rel (%p1450) target = $region76
      $region75: #{tpu_custom_call.1} parent=5 // pred_region
        %s1453 = ssub.s32 %s21, 2
        // Predicated region
        $region77: #{tpu_custom_call.1} parent=75 // pred_check
          %p1454 = pneg %p307
        $region78: #{tpu_custom_call.1} parent=75 // pred_check_branch
          %1456 = sbr.rel (%p1454) target = $region80
        $region79: #{tpu_custom_call.1} parent=75 // pred_region
          %s1457 = sand.u32 %s292, 1
          %s1458 = scalar_lea.sflag [#allocation3], %s1457
          %s1459 = sand.u32 %s292, 1
          %s1460 = smul.addr %s1459, 64
          %s1461 = scalar_lea.vmem [#allocation2], %s1460
          %1463 = dma.done %s1458, 1024
        $region80: #{tpu_custom_call.1} parent=75 // pred_fallthru
          _
      $region76: #{tpu_custom_call.1} parent=5 // pred_fallthru
        _
    $region6: #{tpu_custom_call.1} parent=1 // loop_footer
      %s25 = sadd.s32 1, %s21
    $region7: #{tpu_custom_call.1} parent=1 // loop_footer_branch
      %20 = sbr.rel target = $region3
    $region8: #{tpu_custom_call.1} parent=1 // loop_exit
      _
    %1464 = vsyncpa [#allocation3], 1
    %s1465 = scalar_lea.sflag [#allocation3], 1
    %1466 = vsyncpa %s1465, 1

</llo_original>
